<compile_context>
chip_gen: v7x
topology: tpu7x:2x2x1
jax: 0.10.0
libtpu: 0.0.40
codegen_flags: <defaults>
</compile_context>

<pallas_src>
import functools

import jax
import jax.numpy as jnp
from jax import lax
from jax.experimental import pallas as pl
from jax.experimental.pallas import tpu as pltpu


def _quantize_kernel(x_ref, embed_ref, e2h_ref, q_ref, ind_ref, sse_ref,
                     *, tile_n, n_valid):
    # x_ref:    (tile_n, dim)    flattened inputs for this tile
    # embed_ref:(dim, n_embed)   codebook (grid-invariant resident block)
    # e2h_ref:  (1, n_embed)     precomputed 0.5 * ||E_j||^2 (hoisted)
    x = x_ref[...]
    e = embed_ref[...]
    n_embed = e.shape[1]

    # Full distance is ||x||^2 - 2 x@E + ||E||^2.  ||x||^2 is a per-row
    # constant (dropped) and the remaining terms are scaled by the exact
    # factor 0.5, folded into the hoisted constant:
    #     score = 0.5*||E||^2 - x@E        (same argmin, one fewer VPU pass)
    xe = jnp.dot(x, e, preferred_element_type=jnp.float32)
    score = e2h_ref[...] - xe                                # (tile_n, n_embed)

    # First-occurrence argmin (matches torch.max(-dist) tie behavior).
    iota = lax.broadcasted_iota(jnp.int32, score.shape, 1)
    smin = jnp.min(score, axis=1, keepdims=True)
    ind = jnp.min(jnp.where(score == smin, iota, n_embed),
                  axis=1, keepdims=True).astype(jnp.int32)    # (tile_n, 1)

    # Codebook lookup as a one-hot matmul on the MXU, contracting over the
    # n_embed axis of the untransposed codebook (no embed.T copy).
    # TODO(synk): for very large n_embed, stream the argmin over n_embed
    # chunks (fori_loop carrying running min/argmin) to bound vreg pressure.
    onehot = (iota == ind).astype(e.dtype)
    q = lax.dot_general(onehot, e, (((1,), (1,)), ((), ())),
                        preferred_element_type=jnp.float32)   # (tile_n, dim)

    q_ref[...] = q.astype(q_ref.dtype)
    ind_ref[...] = ind

    # Per-tile SSE partial (summed in the wrapper -> grid axis stays parallel).
    # On a ragged grid, mask tail rows of the last tile only via a scalar-
    # predicated row limit (full tiles see limit == tile_n).
    sq = (q - x.astype(jnp.float32)) ** 2
    if n_valid is not None:
        pid = pl.program_id(0)
        limit = jnp.where(pid == pl.num_programs(0) - 1,
                          n_valid - pid * tile_n, tile_n)
        row = lax.broadcasted_iota(jnp.int32, (tile_n, 1), 0)
        sq = jnp.where(row < limit, sq, 0.0)
    sse_ref[...] = jnp.sum(sq).reshape(1, 1, 1)


def _round_up(x, m):
    return ((x + m - 1) // m) * m


def _choose_tile(n_rows, n_embed, target):
    """Pick tile_n: multiple of 8, capped by the (tile_n, n_embed) temporaries,
    a divisor of n_rows when possible (no padding / ragged tile), and giving
    grid_n >= 2 so the parallel grid axis can shard across v7x's two cores."""
    # ~4 f32 (tile_n, n_embed) temporaries (score / iota / cmp / onehot);
    # keep them within ~8 MiB to contain vreg-spill and VMEM pressure.
    cap = max(64, (8 * 1024 * 1024) // (16 * n_embed))
    target = max(8, min(target, cap, _round_up(n_rows, 8)))
    if n_rows >= 16 and 2 * target > n_rows:
        target = max(8, _round_up((n_rows + 1) // 2, 8))
    if n_rows % 8 == 0:
        best = 0
        d = 8
        while d <= target:
            if n_rows % d == 0:
                best = d
            d += 8
        if best:
            return best, n_rows // best, False
    # Ragged fallback (n_rows not a multiple of 8): ceil-grid + in-kernel mask.
    tile = min(_round_up(target, 8), _round_up(n_rows, 8))
    grid = -(-n_rows // tile)
    return tile, grid, True


def _vmem_estimate_bytes(tile_n, dim, n_embed):
    dbl = 2                                                   # double-buffered I/O
    io = dbl * (2 * tile_n * dim * 4 + tile_n * 4 + 8)        # x in, q out, ind, sse
    resident = dbl * (dim * n_embed * 4 + n_embed * 4)        # embed, e2_half
    temps = 4 * tile_n * n_embed * 4                          # score/iota/onehot/...
    return io + resident + temps


def quantize_forward(x_nhwc, embed, *, tile_n=2048):
    """Forward pass of Quantize (eval path): returns (quantize, diff, embed_ind)."""
    B, H, W, dim = x_nhwc.shape
    dim_e, n_embed = embed.shape
    assert dim == dim_e
    N = B * H * W

    tile_n, grid_n, ragged = _choose_tile(N, n_embed, tile_n)

    flat = x_nhwc.reshape(N, dim)                             # no pad, no copy-back
    # Hoisted 0.5 * ||E_j||^2 (folds the "2 * x@E" factor into the constant).
    e2_half = 0.5 * jnp.sum(embed.astype(jnp.float32) ** 2, axis=0, keepdims=True)

    kernel = functools.partial(_quantize_kernel, tile_n=tile_n,
                               n_valid=N if ragged else None)

    vmem_limit = int(min(64 * 1024 * 1024,
                         max(32 * 1024 * 1024,
                             2 * _vmem_estimate_bytes(tile_n, dim, n_embed))))

    q_flat, ind_flat, sse_part = pl.pallas_call(
        kernel,
        out_shape=(
            jax.ShapeDtypeStruct((N, dim), x_nhwc.dtype),
            jax.ShapeDtypeStruct((N, 1), jnp.int32),
            jax.ShapeDtypeStruct((grid_n, 1, 1), jnp.float32),
        ),
        grid_spec=pltpu.PrefetchScalarGridSpec(
            num_scalar_prefetch=0,
            grid=(grid_n,),
            in_specs=[
                pl.BlockSpec((tile_n, dim), lambda i: (i, 0)),
                # Codebook + hoisted norms are grid-invariant resident blocks.
                # TODO(synk): pipeline_mode=pl.Buffered(1) would halve their
                # VMEM residency for very large codebooks.
                pl.BlockSpec((dim, n_embed), lambda i: (0, 0)),
                pl.BlockSpec((1, n_embed), lambda i: (0, 0)),
            ],
            out_specs=[
                # TODO(synk): if profiling shows the q store is vst-bound (dim=32
                # uses 32/128 lanes), pack 4 rows per 128-lane row before storing.
                pl.BlockSpec((tile_n, dim), lambda i: (i, 0)),
                pl.BlockSpec((tile_n, 1), lambda i: (i, 0)),
                pl.BlockSpec((1, 1, 1), lambda i: (i, 0, 0)),
            ],
        ),
        compiler_params=pltpu.CompilerParams(
            dimension_semantics=("parallel",),
            vmem_limit_bytes=vmem_limit),
    )(flat, embed, e2_half)

    diff = jnp.sum(sse_part) / jnp.float32(N * dim)           # == .pow(2).mean()
    quantize = q_flat.reshape(B, H, W, dim)
    embed_ind = ind_flat.reshape(B, H, W)
    # Straight-through estimator: the forward value of x + stop_gradient(q - x)
    # is exactly q, so the extra elementwise pass is skipped on this eval path.
    # TODO(synk): STE gradient plumbing and training-mode EMA codebook updates
    # (cluster_size / embed_avg buffer mutation) are stateful and not
    # implemented here; this is the eval forward only.
    return quantize, diff, embed_ind


def _reference(x_nhwc, embed):
    """Pure-JAX reference mirroring the PyTorch forward (eval mode)."""
    dim, n_embed = embed.shape
    flat = x_nhwc.reshape(-1, dim)
    dist = (jnp.sum(flat ** 2, axis=1, keepdims=True)
            - 2.0 * flat @ embed
            + jnp.sum(embed ** 2, axis=0, keepdims=True))
    ind = jnp.argmin(dist, axis=1)
    q = embed.T[ind].reshape(x_nhwc.shape)
    diff = jnp.mean((q - x_nhwc) ** 2)
    return q, diff, ind.reshape(x_nhwc.shape[:-1])


if __name__ == "__main__":
    key = jax.random.PRNGKey(0)
    k_x, k_e = jax.random.split(key)

    B, H, W = 2, 16, 16       # N = B*H*W = 512 flattened vectors -> grid of 2 tiles
    dim, n_embed = 32, 128    # Quantize(dim=32, n_embed=128)

    x = jax.random.normal(k_x, (B, H, W, dim), dtype=jnp.float32)
    embed = jax.random.normal(k_e, (dim, n_embed), dtype=jnp.float32)  # buffer init

    quantize, diff, embed_ind = jax.jit(quantize_forward)(x, embed)
    jax.block_until_ready((quantize, diff, embed_ind))

    q_ref, diff_ref, ind_ref = _reference(x, embed)
    assert quantize.shape == x.shape and embed_ind.shape == (B, H, W)
    # Random f32 data -> no near-exact ties at these shapes; indices match the
    # reference exactly (for huge random inputs use a tolerance-based check).
    assert bool(jnp.all(embed_ind == ind_ref))
    assert bool(jnp.allclose(quantize, q_ref, atol=1e-4, rtol=1e-4))
    assert bool(jnp.allclose(diff, diff_ref, atol=1e-5, rtol=1e-4))

    print("KERNEL_OK")
</pallas_src>

<mosaic_0001>
module attributes {stable_mosaic.version = 11 : i64} {
  func.func @_quantize_kernel(%arg0: i32, %arg1: memref<256x32xf32, #tpu.memory_space<vmem>>, %arg2: memref<32x128xf32, #tpu.memory_space<vmem>>, %arg3: memref<1x128xf32, #tpu.memory_space<vmem>>, %arg4: memref<256x32xf32, #tpu.memory_space<vmem>>, %arg5: memref<256x1xi32, #tpu.memory_space<vmem>>, %arg6: memref<1x1x1xf32, #tpu.memory_space<vmem>>) attributes {dimension_semantics = [#tpu.dimension_semantics<parallel>], iteration_bounds = array<i64: 2>, scalar_prefetch = 0 : i64, scratch_operands = 0 : i64, tpu.core_type = #tpu.core_type<tc>, window_params = [{transform_indices = @transform_0, window_bounds = array<i64: 256, 32>}, {pipeline_mode = #tpu.pipeline_mode<synchronous>, transform_indices = @transform_1, window_bounds = array<i64: 32, 128>}, {pipeline_mode = #tpu.pipeline_mode<synchronous>, transform_indices = @transform_2, window_bounds = array<i64: 1, 128>}, {transform_indices = @transform_3, window_bounds = array<i64: 256, 32>}, {transform_indices = @transform_4, window_bounds = array<i64: 256, 1>}, {transform_indices = @transform_5, window_bounds = array<i64: 1, 1, 1>}]} {
    %c0 = arith.constant 0 : index
    %c0_0 = arith.constant 0 : index
    %0 = vector.load %arg1[%c0, %c0_0] : memref<256x32xf32, #tpu.memory_space<vmem>>, vector<256x32xf32>
    %c0_1 = arith.constant 0 : index
    %c0_2 = arith.constant 0 : index
    %1 = vector.load %arg2[%c0_1, %c0_2] : memref<32x128xf32, #tpu.memory_space<vmem>>, vector<32x128xf32>
    %cst = arith.constant dense<0.000000e+00> : vector<256x128xf32>
    %2 = tpu.matmul %0, %1, %cst {dimension_numbers = #tpu.dot_dimension_numbers<[1], [0], [0], [1], [0, 0, 1, 1], [], []>} : vector<256x32xf32>, vector<32x128xf32>, vector<256x128xf32> -> vector<256x128xf32>
    %c0_3 = arith.constant 0 : index
    %c0_4 = arith.constant 0 : index
    %3 = vector.load %arg3[%c0_3, %c0_4] : memref<1x128xf32, #tpu.memory_space<vmem>>, vector<1x128xf32>
    %4 = vector.broadcast %3 : vector<1x128xf32> to vector<256x128xf32>
    %5 = arith.subf %4, %2 : vector<256x128xf32>
    %6 = tpu.iota {dimensions = array<i32: 1>} : vector<256x128xi32>
    %cst_5 = arith.constant dense<0x7F800000> : vector<256xf32>
    %7 = vector.multi_reduction <minimumf>, %5, %cst_5 [1] : vector<256x128xf32> to vector<256xf32>
    %8 = vector.shape_cast %7 : vector<256xf32> to vector<256x1xf32>
    %9 = vector.broadcast %8 : vector<256x1xf32> to vector<256x128xf32>
    %10 = arith.cmpf oeq, %5, %9 : vector<256x128xf32>
    %c128_i32 = arith.constant 128 : i32
    %11 = vector.broadcast %c128_i32 : i32 to vector<256x128xi32>
    %12 = arith.select %10, %6, %11 : vector<256x128xi1>, vector<256x128xi32>
    %cst_6 = arith.constant dense<2147483647> : vector<256xi32>
    %13 = vector.multi_reduction <minsi>, %12, %cst_6 [1] : vector<256x128xi32> to vector<256xi32>
    %14 = vector.shape_cast %13 : vector<256xi32> to vector<256x1xi32>
    %15 = vector.broadcast %14 : vector<256x1xi32> to vector<256x128xi32>
    %16 = arith.cmpi eq, %6, %15 : vector<256x128xi32>
    %17 = arith.extui %16 : vector<256x128xi1> to vector<256x128xi32>
    %18 = arith.sitofp %17 : vector<256x128xi32> to vector<256x128xf32>
    %cst_7 = arith.constant dense<0.000000e+00> : vector<256x32xf32>
    %19 = tpu.matmul %18, %1, %cst_7 {dimension_numbers = #tpu.dot_dimension_numbers<[1], [1], [0], [0], [0, 0, 1, 0], [], []>} : vector<256x128xf32>, vector<32x128xf32>, vector<256x32xf32> -> vector<256x32xf32>
    %c0_8 = arith.constant 0 : index
    %c0_9 = arith.constant 0 : index
    %20 = vector.load %arg4[%c0_8, %c0_9] : memref<256x32xf32, #tpu.memory_space<vmem>>, vector<256x32xf32>
    tpu.vector_store %arg4[%c0_8, %c0_9], %19 {strides = array<i32>} : memref<256x32xf32, #tpu.memory_space<vmem>>, vector<256x32xf32>,
    %c0_10 = arith.constant 0 : index
    %c0_11 = arith.constant 0 : index
    %21 = vector.load %arg5[%c0_10, %c0_11] : memref<256x1xi32, #tpu.memory_space<vmem>>, vector<256x1xi32>
    tpu.vector_store %arg5[%c0_10, %c0_11], %14 {strides = array<i32>} : memref<256x1xi32, #tpu.memory_space<vmem>>, vector<256x1xi32>,
    %22 = arith.subf %19, %0 : vector<256x32xf32>
    %23 = arith.mulf %22, %22 : vector<256x32xf32>
    %24 = vector.shape_cast %23 : vector<256x32xf32> to vector<1x256x32xf32>
    %cst_12 = arith.constant dense<0.000000e+00> : vector<1xf32>
    %25 = vector.multi_reduction <add>, %24, %cst_12 [1, 2] : vector<1x256x32xf32> to vector<1xf32>
    %26 = vector.shape_cast %25 : vector<1xf32> to vector<1x1x1xf32>
    %27 = vector.extract %26[0, 0, 0] : f32 from vector<1x1x1xf32>
    %28 = vector.broadcast %27 : f32 to vector<1x1x1xf32>
    %c0_13 = arith.constant 0 : index
    %c0_14 = arith.constant 0 : index
    %c0_15 = arith.constant 0 : index
    %29 = vector.load %arg6[%c0_13, %c0_14, %c0_15] : memref<1x1x1xf32, #tpu.memory_space<vmem>>, vector<1x1x1xf32>
    tpu.vector_store %arg6[%c0_13, %c0_14, %c0_15], %28 {strides = array<i32>} : memref<1x1x1xf32, #tpu.memory_space<vmem>>, vector<1x1x1xf32>,
    return
  }
  func.func @transform_0(%arg0: i32) -> (i32, i32) {
    %c0_i32 = arith.constant 0 : i32
    %c0_i32_0 = arith.constant 0 : i32
    return %arg0, %c0_i32 : i32, i32
  }
  func.func @transform_1(%arg0: i32) -> (i32, i32) {
    %c0_i32 = arith.constant 0 : i32
    %c0_i32_0 = arith.constant 0 : i32
    %c0_i32_1 = arith.constant 0 : i32
    return %c0_i32, %c0_i32_0 : i32, i32
  }
  func.func @transform_2(%arg0: i32) -> (i32, i32) {
    %c0_i32 = arith.constant 0 : i32
    %c0_i32_0 = arith.constant 0 : i32
    %c0_i32_1 = arith.constant 0 : i32
    return %c0_i32, %c0_i32_0 : i32, i32
  }
  func.func @transform_3(%arg0: i32) -> (i32, i32) {
    %c0_i32 = arith.constant 0 : i32
    %c0_i32_0 = arith.constant 0 : i32
    return %arg0, %c0_i32 : i32, i32
  }
  func.func @transform_4(%arg0: i32) -> (i32, i32) {
    %c0_i32 = arith.constant 0 : i32
    %c0_i32_0 = arith.constant 0 : i32
    return %arg0, %c0_i32 : i32, i32
  }
  func.func @transform_5(%arg0: i32) -> (i32, i32, i32) {
    %c0_i32 = arith.constant 0 : i32
    %c0_i32_0 = arith.constant 0 : i32
    %c0_i32_1 = arith.constant 0 : i32
    return %arg0, %c0_i32, %c0_i32_0 : i32, i32, i32
  }
}

</mosaic_0001>

<llo_original>
// kernel: quantize_forward.1
$region0: #{quantize_forward.1}
  #allocation0 [shape = 'u32[]', space=smem, size = 0x4, offset = 0x4, fixed_abs, tag = 'smem constant byte address 0x4 - core index']
  #allocation1 [shape = 'u32[144,128]{1,0:T(1,128)}', space=vmem, size = 0x12000, scoped, tag = 'internal scratch']
  %s0 = inlined_call_operand.hbm [shape: f32[512,32], index: 0, kind: input, shape index: {}]
  %s1 = inlined_call_operand.vmem [shape: f32[32,128], index: 1, kind: input, shape index: {}]
  %s2 = inlined_call_operand.vmem [shape: f32[1,128], index: 2, kind: input, shape index: {}]
  %s3 = inlined_call_operand.hbm [shape: f32[512,32], index: 3, kind: output, shape index: {0}]
  %s4 = inlined_call_operand.vmem [shape: s32[512,1], index: 4, kind: output, shape index: {1}]
  %s5 = inlined_call_operand.vmem [shape: f32[2,1,1], index: 5, kind: output, shape index: {2}]
  %6 = xla_tuple %s3, %s4, %s5
  %s7 = sld [smem:[#allocation0]]
  $region65: #{quantize_forward.1} parent=0
    _
  %s9 = ssub.s32 1, %s7
  %s10 = scalar_select 0, %s9, %s7
  $region1: #{quantize_forward.1} parent=0
    #allocation2 [shape = 'u8[262144]{0}', space=vmem, size = 0x40000, scoped, tag = 'input window, operand 0']
    #allocation3 [shape = 's32[2]{0}', space=sflag, size = 0x8, scoped, tag = 'scoped memory for quantize_forward.1']
    #allocation4 [shape = 's32[2]{0}', space=sflag, size = 0x8, scoped, tag = 'scoped memory for quantize_forward.1']
    #allocation5 [shape = 'u8[262144]{0}', space=vmem, size = 0x40000, scoped, tag = 'output window, operand 0']
    %11 = vsyncpa [#allocation3], 0
    %s12 = scalar_lea.sflag [#allocation3], 1
    %13 = vsyncpa %s12, 0
    %14 = vsyncpa [#allocation4], 0
    %s15 = scalar_lea.sflag [#allocation4], 1
    %16 = vsyncpa %s15, 0
    loop: start=0, step=1, limit=4
    $region2: #{quantize_forward.1} parent=1 // loop_pre_header
      _
    $region3: #{quantize_forward.1} parent=1 // loop_header
      %s18 = sphi 0, %s22
      %p19 = scmp.ge.s32.totalorder %s18, 4
      %s28 = sphi 0, %s30
      %s31 = sphi 0, %s28
      %s32 = sphi 0, %s31
      %s48 = sphi 0, %s32
      %s52 = sphi 0, %s52
      %s54 = sphi 0, %s52
      %s55 = sphi 0, %s54
      %s69 = sphi 0, %s55
      %s73 = sphi 0, %s73
      %s75 = sphi 0, %s73
      %s76 = sphi 0, %s75
      %s90 = sphi 0, %s76
      %s96 = sphi 0, %s98
      %s99 = sphi 0, %s96
      %s100 = sphi 0, %s99
      %s116 = sphi 0, %s100
      %s122 = sphi 0, %s124
      %s125 = sphi 0, %s122
      %s126 = sphi 0, %s125
      %s142 = sphi 0, %s126
      %s148 = sphi 0, %s150
      %s151 = sphi 0, %s148
      %s152 = sphi 0, %s151
      %s168 = sphi 0, %s152
    $region4: #{quantize_forward.1} parent=1 // loop_header_branch
      %21 = sbr.rel (%p19) target = $region8
    $region5: #{quantize_forward.1} parent=1 // loop_body
      %s23 = ssub.s32 %s18, 1
      %s24 = ssub.s32 %s18, 2
      %s25 = sadd.s32 %s18, 1
      %s26 = ssub.s32 %s18, %s25
      %p27 = scmp.eq.s32.totalorder %s26, 0
      %s29 = sadd.s32 %s28, 1
      %s30 = scalar_select %p27, %s28, %s29
      %p33 = pneg %p27
      %p34 = scmp.eq.s32.totalorder %s18, 1
      %p35 = por %p33, %p34
      %p36 = scmp.ne.s32.totalorder %s28, %s31
      %p37 = scmp.eq.s32.totalorder %s18, 0
      %p38 = por %p36, %p37
      %p39 = scmp.ne.s32.totalorder %s28, %s31
      %p40 = scmp.eq.s32.totalorder %s23, 1
      %p41 = por %p39, %p40
      %p42 = scmp.ne.s32.totalorder %s31, %s32
      %p43 = scmp.eq.s32.totalorder %s23, 0
      %p44 = por %p42, %p43
      %p45 = scmp.ne.s32.totalorder %s31, %s32
      %p46 = scmp.eq.s32.totalorder %s24, 1
      %p47 = por %p45, %p46
      %p49 = scmp.ne.s32.totalorder %s32, %s48
      %p50 = scmp.eq.s32.totalorder %s24, 0
      %p51 = por %p49, %p50
      %s53 = sadd.s32 %s52, 1
      %p56 = scmp.eq.s32.totalorder %s18, 1
      %p57 = scmp.ne.s32.totalorder %s52, %s54
      %p58 = scmp.eq.s32.totalorder %s18, 0
      %p59 = por %p57, %p58
      %p60 = scmp.ne.s32.totalorder %s52, %s54
      %p61 = scmp.eq.s32.totalorder %s23, 1
      %p62 = por %p60, %p61
      %p63 = scmp.ne.s32.totalorder %s54, %s55
      %p64 = scmp.eq.s32.totalorder %s23, 0
      %p65 = por %p63, %p64
      %p66 = scmp.ne.s32.totalorder %s54, %s55
      %p67 = scmp.eq.s32.totalorder %s24, 1
      %p68 = por %p66, %p67
      %p70 = scmp.ne.s32.totalorder %s55, %s69
      %p71 = scmp.eq.s32.totalorder %s24, 0
      %p72 = por %p70, %p71
      %s74 = sadd.s32 %s73, 1
      %p77 = scmp.eq.s32.totalorder %s18, 1
      %p78 = scmp.ne.s32.totalorder %s73, %s75
      %p79 = scmp.eq.s32.totalorder %s18, 0
      %p80 = por %p78, %p79
      %p81 = scmp.ne.s32.totalorder %s73, %s75
      %p82 = scmp.eq.s32.totalorder %s23, 1
      %p83 = por %p81, %p82
      %p84 = scmp.ne.s32.totalorder %s75, %s76
      %p85 = scmp.eq.s32.totalorder %s23, 0
      %p86 = por %p84, %p85
      %p87 = scmp.ne.s32.totalorder %s75, %s76
      %p88 = scmp.eq.s32.totalorder %s24, 1
      %p89 = por %p87, %p88
      %p91 = scmp.ne.s32.totalorder %s76, %s90
      %p92 = scmp.eq.s32.totalorder %s24, 0
      %p93 = por %p91, %p92
      %s94 = ssub.s32 %s18, %s25
      %p95 = scmp.eq.s32.totalorder %s94, 0
      %s97 = sadd.s32 %s96, 1
      %s98 = scalar_select %p95, %s96, %s97
      %p101 = pneg %p95
      %p102 = scmp.eq.s32.totalorder %s18, 1
      %p103 = por %p101, %p102
      %p104 = scmp.ne.s32.totalorder %s96, %s99
      %p105 = scmp.eq.s32.totalorder %s18, 0
      %p106 = por %p104, %p105
      %p107 = scmp.ne.s32.totalorder %s96, %s99
      %p108 = scmp.eq.s32.totalorder %s23, 1
      %p109 = por %p107, %p108
      %p110 = scmp.ne.s32.totalorder %s99, %s100
      %p111 = scmp.eq.s32.totalorder %s23, 0
      %p112 = por %p110, %p111
      %p113 = scmp.ne.s32.totalorder %s99, %s100
      %p114 = scmp.eq.s32.totalorder %s24, 1
      %p115 = por %p113, %p114
      %p117 = scmp.ne.s32.totalorder %s100, %s116
      %p118 = scmp.eq.s32.totalorder %s24, 0
      %p119 = por %p117, %p118
      %s120 = ssub.s32 %s18, %s25
      %p121 = scmp.eq.s32.totalorder %s120, 0
      %s123 = sadd.s32 %s122, 1
      %s124 = scalar_select %p121, %s122, %s123
      %p127 = pneg %p121
      %p128 = scmp.eq.s32.totalorder %s18, 1
      %p129 = por %p127, %p128
      %p130 = scmp.ne.s32.totalorder %s122, %s125
      %p131 = scmp.eq.s32.totalorder %s18, 0
      %p132 = por %p130, %p131
      %p133 = scmp.ne.s32.totalorder %s122, %s125
      %p134 = scmp.eq.s32.totalorder %s23, 1
      %p135 = por %p133, %p134
      %p136 = scmp.ne.s32.totalorder %s125, %s126
      %p137 = scmp.eq.s32.totalorder %s23, 0
      %p138 = por %p136, %p137
      %p139 = scmp.ne.s32.totalorder %s125, %s126
      %p140 = scmp.eq.s32.totalorder %s24, 1
      %p141 = por %p139, %p140
      %p143 = scmp.ne.s32.totalorder %s126, %s142
      %p144 = scmp.eq.s32.totalorder %s24, 0
      %p145 = por %p143, %p144
      %s146 = ssub.s32 %s18, %s25
      %p147 = scmp.eq.s32.totalorder %s146, 0
      %s149 = sadd.s32 %s148, 1
      %s150 = scalar_select %p147, %s148, %s149
      %p153 = pneg %p147
      %p154 = scmp.eq.s32.totalorder %s18, 1
      %p155 = por %p153, %p154
      %p156 = scmp.ne.s32.totalorder %s148, %s151
      %p157 = scmp.eq.s32.totalorder %s18, 0
      %p158 = por %p156, %p157
      %p159 = scmp.ne.s32.totalorder %s148, %s151
      %p160 = scmp.eq.s32.totalorder %s23, 1
      %p161 = por %p159, %p160
      %p162 = scmp.ne.s32.totalorder %s151, %s152
      %p163 = scmp.eq.s32.totalorder %s23, 0
      %p164 = por %p162, %p163
      %p165 = scmp.ne.s32.totalorder %s151, %s152
      %p166 = scmp.eq.s32.totalorder %s24, 1
      %p167 = por %p165, %p166
      %p169 = scmp.ne.s32.totalorder %s152, %s168
      %p170 = scmp.eq.s32.totalorder %s24, 0
      %p171 = por %p169, %p170
      %p172 = scmp.le.s32.totalorder 1, %s18
      %p173 = scmp.lt.s32.totalorder %s18, 3
      %p174 = pnand %p172, %p173
      %p175 = pneg %p174
      // Predicated region
      $region9: #{quantize_forward.1} parent=5 // pred_check
        _
      $region10: #{quantize_forward.1} parent=5 // pred_check_branch
        %177 = sbr.rel (%p174) target = $region12
      $region11: #{quantize_forward.1} parent=5 // pred_region
        %s178 = ssub.s32 %s18, 1
        // Predicated region
        $region13: #{quantize_forward.1} parent=11 // pred_check
          %p179 = pneg %p65
        $region14: #{quantize_forward.1} parent=11 // pred_check_branch
          %181 = sbr.rel (%p179) target = $region16
        $region15: #{quantize_forward.1} parent=11 // pred_region
          _
        $region16: #{quantize_forward.1} parent=11 // pred_fallthru
          _
        // Predicated region
        $region17: #{quantize_forward.1} parent=11 // pred_check
          %p182 = pneg %p86
        $region18: #{quantize_forward.1} parent=11 // pred_check_branch
          %184 = sbr.rel (%p182) target = $region20
        $region19: #{quantize_forward.1} parent=11 // pred_region
          _
        $region20: #{quantize_forward.1} parent=11 // pred_fallthru
          _
      $region12: #{quantize_forward.1} parent=5 // pred_fallthru
        _
      %p185 = scmp.lt.s32.totalorder %s18, 2
      // Predicated region
      $region21: #{quantize_forward.1} parent=5 // pred_check
        %p186 = pneg %p185
      $region22: #{quantize_forward.1} parent=5 // pred_check_branch
        %188 = sbr.rel (%p186) target = $region24
      $region23: #{quantize_forward.1} parent=5 // pred_region
        // Predicated region
        $region25: #{quantize_forward.1} parent=23 // pred_check
          %p189 = pneg %p38
        $region26: #{quantize_forward.1} parent=23 // pred_check_branch
          %191 = sbr.rel (%p189) target = $region28
        $region27: #{quantize_forward.1} parent=23 // pred_region
          %s192 = sand.u32 %s28, 1
          %s193 = scalar_lea.sflag [#allocation3], %s192
          %s194 = sand.u32 %s28, 1
          %s195 = smul.addr %s194, 256
          %s196 = scalar_lea.vmem [#allocation2], %s195
          %s197 = smul.u32 32, %s18
          %s199 = ssub.s32 4096, 4096
          %200 = vsyncadd %s193, %s199
          %s201 = smul.addr %s197, 128
          %s202 = scalar_lea.hbm %s0, %s201
          %s203 = sshll.u32 %s196, 4
          %s204 = int_to_ptr.vmem [resolvable:$true] %s203
          %209 = dma.hbm_to_vmem [thread:$0]  %s202, 4096, %s204, %s193, 128, 128, 8
        $region28: #{quantize_forward.1} parent=23 // pred_fallthru
          _
      $region24: #{quantize_forward.1} parent=5 // pred_fallthru
        _
      %p210 = scmp.le.s32.totalorder 1, %s18
      %p211 = scmp.lt.s32.totalorder %s18, 3
      %p212 = pnand %p210, %p211
      %p213 = pneg %p212
      // Predicated region
      $region29: #{quantize_forward.1} parent=5 // pred_check
        _
      $region30: #{quantize_forward.1} parent=5 // pred_check_branch
        %215 = sbr.rel (%p212) target = $region32
      $region31: #{quantize_forward.1} parent=5 // pred_region
        %s216 = ssub.s32 %s18, 1
        %s217 = sand.u32 %s31, 1
        %s218 = scalar_lea.sflag [#allocation3], %s217
        %s219 = sand.u32 %s31, 1
        %s220 = smul.addr %s219, 256
        %s221 = scalar_lea.vmem [#allocation2], %s220
        // Predicated region
        $region33: #{quantize_forward.1} parent=31 // pred_check
          %p222 = pneg %p44
        $region34: #{quantize_forward.1} parent=31 // pred_check_branch
          %224 = sbr.rel (%p222) target = $region36
        $region35: #{quantize_forward.1} parent=31 // pred_region
          %225 = dma.done %s218, 4096
        $region36: #{quantize_forward.1} parent=31 // pred_fallthru
          _
        %s226 = sand.u32 %s31, 1
        %s227 = scalar_lea.sflag [#allocation3], %s226
        %s228 = sand.u32 %s31, 1
        %s229 = smul.addr %s228, 256
        %s230 = scalar_lea.vmem [#allocation2], %s229
        %p231 = pneg %p44
        %p232 = pneg %p41
        %p233 = pneg %p65
        %p234 = pneg %p62
        %p235 = pneg %p86
        %p236 = pneg %p83
        %p237 = pneg %p112
        %p238 = pneg %p109
        %s239 = sand.u32 %s99, 1
        %s240 = scalar_lea.sflag [#allocation4], %s239
        %s241 = sand.u32 %s99, 1
        %s242 = smul.addr %s241, 256
        %s243 = scalar_lea.vmem [#allocation5], %s242
        %p244 = pneg %p138
        %p245 = pneg %p135
        %s246 = smul.u32 32, %s23
        %p247 = scmp.lt.s32.totalorder %s246, 63
        %s248 = scalar_select %p247, %s246, 63
        %s249 = smul.addr %s248, 8
        %s250 = scalar_lea.vmem %s4, %s249
        %p251 = pneg %p164
        %p252 = pneg %p161
        %p253 = scmp.lt.s32.totalorder %s23, 1
        %s254 = scalar_select %p253, %s23, 1
        %s255 = scalar_lea.vmem %s5, %s254
        %s256 = smul.u32 32, %s23
        %s257 = smul.u32 32, %s23
        %s258 = smul.u32 32, %s23
        %p259 = scmp.lt.s32.totalorder %s258, 63
        %s260 = scalar_select %p259, %s258, 63
        %s261 = smul.addr %s260, 8
        %s262 = scalar_lea.vmem %s4, %s261
        %s263 = smul.u32 32, %s23
        %p264 = scmp.lt.s32.totalorder %s23, 1
        %s265 = scalar_select %p264, %s23, 1
        %s266 = scalar_lea.vmem %s5, %s265
        %v267 = vld [vmem:[%s221] sm:$0xff]
        %v268 = vld [vmem:[%s221 + $0x8] sm:$0xff]
        %v269 = vld [vmem:[%s221 + $0x10] sm:$0xff]
        %v270 = vld [vmem:[%s221 + $0x18] sm:$0xff]
        %v271 = vld [vmem:[%s221 + $0x20] sm:$0xff]
        %v272 = vld [vmem:[%s221 + $0x28] sm:$0xff]
        %v273 = vld [vmem:[%s221 + $0x30] sm:$0xff]
        %v274 = vld [vmem:[%s221 + $0x38] sm:$0xff]
        %v275 = vld [vmem:[%s221 + $0x40] sm:$0xff]
        %v276 = vld [vmem:[%s221 + $0x48] sm:$0xff]
        %v277 = vld [vmem:[%s221 + $0x50] sm:$0xff]
        %v278 = vld [vmem:[%s221 + $0x58] sm:$0xff]
        %v279 = vld [vmem:[%s221 + $0x60] sm:$0xff]
        %v280 = vld [vmem:[%s221 + $0x68] sm:$0xff]
        %v281 = vld [vmem:[%s221 + $0x70] sm:$0xff]
        %v282 = vld [vmem:[%s221 + $0x78] sm:$0xff]
        %v283 = vld [vmem:[%s221 + $0x80] sm:$0xff]
        %v284 = vld [vmem:[%s221 + $0x88] sm:$0xff]
        %v285 = vld [vmem:[%s221 + $0x90] sm:$0xff]
        %v286 = vld [vmem:[%s221 + $0x98] sm:$0xff]
        %v287 = vld [vmem:[%s221 + $0xa0] sm:$0xff]
        %v288 = vld [vmem:[%s221 + $0xa8] sm:$0xff]
        %v289 = vld [vmem:[%s221 + $0xb0] sm:$0xff]
        %v290 = vld [vmem:[%s221 + $0xb8] sm:$0xff]
        %v291 = vld [vmem:[%s221 + $0xc0] sm:$0xff]
        %v292 = vld [vmem:[%s221 + $0xc8] sm:$0xff]
        %v293 = vld [vmem:[%s221 + $0xd0] sm:$0xff]
        %v294 = vld [vmem:[%s221 + $0xd8] sm:$0xff]
        %v295 = vld [vmem:[%s221 + $0xe0] sm:$0xff]
        %v296 = vld [vmem:[%s221 + $0xe8] sm:$0xff]
        %v297 = vld [vmem:[%s221 + $0xf0] sm:$0xff]
        %v298 = vld [vmem:[%s221 + $0xf8] sm:$0xff]
        %v299 = vld [vmem:[%s1] sm:$0xff]
        %v300 = vld [vmem:[%s1 + $0x8] sm:$0xff]
        %v301 = vld [vmem:[%s1 + $0x10] sm:$0xff]
        %v302 = vld [vmem:[%s1 + $0x18] sm:$0xff]
        %vm303 = vcmask 261120
        %v305 = vsel %vm303, %v267, 0
        %v308 = vsel %vm303, %v268, 0
        %v311 = vsel %vm303, %v269, 0
        %v314 = vsel %vm303, %v270, 0
        %v317 = vsel %vm303, %v271, 0
        %v320 = vsel %vm303, %v272, 0
        %v323 = vsel %vm303, %v273, 0
        %v326 = vsel %vm303, %v274, 0
        %v329 = vsel %vm303, %v275, 0
        %v332 = vsel %vm303, %v276, 0
        %v335 = vsel %vm303, %v277, 0
        %v338 = vsel %vm303, %v278, 0
        %v341 = vsel %vm303, %v279, 0
        %v344 = vsel %vm303, %v280, 0
        %v347 = vsel %vm303, %v281, 0
        %v350 = vsel %vm303, %v282, 0
        %v353 = vsel %vm303, %v283, 0
        %v356 = vsel %vm303, %v284, 0
        %v359 = vsel %vm303, %v285, 0
        %v362 = vsel %vm303, %v286, 0
        %v365 = vsel %vm303, %v287, 0
        %v368 = vsel %vm303, %v288, 0
        %v371 = vsel %vm303, %v289, 0
        %v374 = vsel %vm303, %v290, 0
        %v377 = vsel %vm303, %v291, 0
        %v380 = vsel %vm303, %v292, 0
        %v383 = vsel %vm303, %v293, 0
        %v386 = vsel %vm303, %v294, 0
        %v389 = vsel %vm303, %v295, 0
        %v392 = vsel %vm303, %v296, 0
        %v395 = vsel %vm303, %v297, 0
        %v398 = vsel %vm303, %v298, 0
        %400 = vmatprep.subr.mxu0 0.0
        %401 = vmatpush1.msra.mxu0 %v299
        %402 = vmatprep.subr.mxu0 0.0
        %403 = vmatpush1.msra.mxu0 %v300
        %404 = vmatprep.subr.mxu0 0.0
        %405 = vmatpush1.msra.mxu0 %v301
        %406 = vmatprep.subr.mxu0 0.0
        %407 = vmatpush1.msra.mxu0 %v302
        %408 = vmatprep.subr.mxu0 0.0
        %409 = vmatpush1.msra.mxu0 0.0
        %410 = vmatprep.subr.mxu0 0.0
        %411 = vmatpush1.msra.mxu0 0.0
        %412 = vmatprep.subr.mxu0 0.0
        %413 = vmatpush1.msra.mxu0 0.0
        %414 = vmatprep.subr.mxu0 0.0
        %415 = vmatpush1.msra.mxu0 0.0
        %416 = vmatprep.subr.mxu0 0.0
        %417 = vmatpush1.msra.mxu0 0.0
        %418 = vmatprep.subr.mxu0 0.0
        %419 = vmatpush1.msra.mxu0 0.0
        %420 = vmatprep.subr.mxu0 0.0
        %421 = vmatpush1.msra.mxu0 0.0
        %422 = vmatprep.subr.mxu0 0.0
        %423 = vmatpush1.msra.mxu0 0.0
        %424 = vmatprep.subr.mxu0 0.0
        %425 = vmatpush1.msra.mxu0 0.0
        %426 = vmatprep.subr.mxu0 0.0
        %427 = vmatpush1.msra.mxu0 0.0
        %428 = vmatprep.subr.mxu0 0.0
        %429 = vmatpush1.msra.mxu0 0.0
        %430 = vmatprep.subr.mxu0 0.0
        %431 = vmatpush1.msra.mxu0 0.0
        %432 = vmatprep.subr.mxu0 0.0
        %433 = vmatpush1.msra.mxu0 0.0
        %434 = vmatprep.subr.mxu0 0.0
        %435 = vmatpush1.msra.mxu0 0.0
        %436 = vmatprep.subr.mxu0 0.0
        %437 = vmatpush1.msra.mxu0 0.0
        %438 = vmatprep.subr.mxu0 0.0
        %439 = vmatpush1.msra.mxu0 0.0
        %440 = vmatprep.subr.mxu0 0.0
        %441 = vmatpush1.msra.mxu0 0.0
        %442 = vmatprep.subr.mxu0 0.0
        %443 = vmatpush1.msra.mxu0 0.0
        %444 = vmatprep.subr.mxu0 0.0
        %445 = vmatpush1.msra.mxu0 0.0
        %446 = vmatprep.subr.mxu0 0.0
        %447 = vmatpush1.msra.mxu0 0.0
        %448 = vmatprep.subr.mxu0 0.0
        %449 = vmatpush1.msra.mxu0 0.0
        %450 = vmatprep.subr.mxu0 0.0
        %451 = vmatpush1.msra.mxu0 0.0
        %452 = vmatprep.subr.mxu0 0.0
        %453 = vmatpush1.msra.mxu0 0.0
        %454 = vmatprep.subr.mxu0 0.0
        %455 = vmatpush1.msra.mxu0 0.0
        %456 = vmatprep.subr.mxu0 0.0
        %457 = vmatpush1.msra.mxu0 0.0
        %458 = vmatprep.subr.mxu0 0.0
        %459 = vmatpush1.msra.mxu0 0.0
        %460 = vmatprep.subr.mxu0 0.0
        %461 = vmatpush1.msra.mxu0 0.0
        %462 = vmatprep.subr.mxu0 0.0
        %463 = vmatpush1.msra.mxu0 0.0
        %464 = vmatprep.mubr.f32.mxu0 0.0
        %465 = vmatmul.mubr.f32.gmra.mrb[0].mxu0 %v305
        %v466 = vpop.f32.mrb[0].mxu0
        %v467 = vadd.f32 0.0, %v466
        %v468 = vpop.f32.mrb[0].mxu0
        %469 = vmatprep.mubr.f32.mxu0 0.0
        %470 = vmatmul.mubr.f32.gmra.mrb[0].mxu0 %v308
        %v471 = vpop.f32.mrb[0].mxu0
        %v472 = vadd.f32 0.0, %v471
        %v473 = vpop.f32.mrb[0].mxu0
        %474 = vmatprep.mubr.f32.mxu0 0.0
        %475 = vmatmul.mubr.f32.gmra.mrb[0].mxu0 %v311
        %v476 = vpop.f32.mrb[0].mxu0
        %v477 = vadd.f32 0.0, %v476
        %v478 = vpop.f32.mrb[0].mxu0
        %479 = vmatprep.mubr.f32.mxu0 0.0
        %480 = vmatmul.mubr.f32.gmra.mrb[0].mxu0 %v314
        %v481 = vpop.f32.mrb[0].mxu0
        %v482 = vadd.f32 0.0, %v481
        %v483 = vpop.f32.mrb[0].mxu0
        %484 = vmatprep.mubr.f32.mxu0 0.0
        %485 = vmatmul.mubr.f32.gmra.mrb[0].mxu0 %v317
        %v486 = vpop.f32.mrb[0].mxu0
        %v487 = vadd.f32 0.0, %v486
        %v488 = vpop.f32.mrb[0].mxu0
        %489 = vmatprep.mubr.f32.mxu0 0.0
        %490 = vmatmul.mubr.f32.gmra.mrb[0].mxu0 %v320
        %v491 = vpop.f32.mrb[0].mxu0
        %v492 = vadd.f32 0.0, %v491
        %v493 = vpop.f32.mrb[0].mxu0
        %494 = vmatprep.mubr.f32.mxu0 0.0
        %495 = vmatmul.mubr.f32.gmra.mrb[0].mxu0 %v323
        %v496 = vpop.f32.mrb[0].mxu0
        %v497 = vadd.f32 0.0, %v496
        %v498 = vpop.f32.mrb[0].mxu0
        %499 = vmatprep.mubr.f32.mxu0 0.0
        %500 = vmatmul.mubr.f32.gmra.mrb[0].mxu0 %v326
        %v501 = vpop.f32.mrb[0].mxu0
        %v502 = vadd.f32 0.0, %v501
        %v503 = vpop.f32.mrb[0].mxu0
        %504 = vmatprep.mubr.f32.mxu0 0.0
        %505 = vmatmul.mubr.f32.gmra.mrb[0].mxu0 %v329
        %v506 = vpop.f32.mrb[0].mxu0
        %v507 = vadd.f32 0.0, %v506
        %v508 = vpop.f32.mrb[0].mxu0
        %509 = vmatprep.mubr.f32.mxu0 0.0
        %510 = vmatmul.mubr.f32.gmra.mrb[0].mxu0 %v332
        %v511 = vpop.f32.mrb[0].mxu0
        %v512 = vadd.f32 0.0, %v511
        %v513 = vpop.f32.mrb[0].mxu0
        %514 = vmatprep.mubr.f32.mxu0 0.0
        %515 = vmatmul.mubr.f32.gmra.mrb[0].mxu0 %v335
        %v516 = vpop.f32.mrb[0].mxu0
        %v517 = vadd.f32 0.0, %v516
        %v518 = vpop.f32.mrb[0].mxu0
        %519 = vmatprep.mubr.f32.mxu0 0.0
        %520 = vmatmul.mubr.f32.gmra.mrb[0].mxu0 %v338
        %v521 = vpop.f32.mrb[0].mxu0
        %v522 = vadd.f32 0.0, %v521
        %v523 = vpop.f32.mrb[0].mxu0
        %524 = vmatprep.mubr.f32.mxu0 0.0
        %525 = vmatmul.mubr.f32.gmra.mrb[0].mxu0 %v341
        %v526 = vpop.f32.mrb[0].mxu0
        %v527 = vadd.f32 0.0, %v526
        %v528 = vpop.f32.mrb[0].mxu0
        %529 = vmatprep.mubr.f32.mxu0 0.0
        %530 = vmatmul.mubr.f32.gmra.mrb[0].mxu0 %v344
        %v531 = vpop.f32.mrb[0].mxu0
        %v532 = vadd.f32 0.0, %v531
        %v533 = vpop.f32.mrb[0].mxu0
        %534 = vmatprep.mubr.f32.mxu0 0.0
        %535 = vmatmul.mubr.f32.gmra.mrb[0].mxu0 %v347
        %v536 = vpop.f32.mrb[0].mxu0
        %v537 = vadd.f32 0.0, %v536
        %v538 = vpop.f32.mrb[0].mxu0
        %539 = vmatprep.mubr.f32.mxu0 0.0
        %540 = vmatmul.mubr.f32.gmra.mrb[0].mxu0 %v350
        %v541 = vpop.f32.mrb[0].mxu0
        %v542 = vadd.f32 0.0, %v541
        %v543 = vpop.f32.mrb[0].mxu0
        %544 = vmatprep.mubr.f32.mxu0 0.0
        %545 = vmatmul.mubr.f32.gmra.mrb[0].mxu0 %v353
        %v546 = vpop.f32.mrb[0].mxu0
        %v547 = vadd.f32 0.0, %v546
        %v548 = vpop.f32.mrb[0].mxu0
        %549 = vmatprep.mubr.f32.mxu0 0.0
        %550 = vmatmul.mubr.f32.gmra.mrb[0].mxu0 %v356
        %v551 = vpop.f32.mrb[0].mxu0
        %v552 = vadd.f32 0.0, %v551
        %v553 = vpop.f32.mrb[0].mxu0
        %554 = vmatprep.mubr.f32.mxu0 0.0
        %555 = vmatmul.mubr.f32.gmra.mrb[0].mxu0 %v359
        %v556 = vpop.f32.mrb[0].mxu0
        %v557 = vadd.f32 0.0, %v556
        %v558 = vpop.f32.mrb[0].mxu0
        %559 = vmatprep.mubr.f32.mxu0 0.0
        %560 = vmatmul.mubr.f32.gmra.mrb[0].mxu0 %v362
        %v561 = vpop.f32.mrb[0].mxu0
        %v562 = vadd.f32 0.0, %v561
        %v563 = vpop.f32.mrb[0].mxu0
        %564 = vmatprep.mubr.f32.mxu0 0.0
        %565 = vmatmul.mubr.f32.gmra.mrb[0].mxu0 %v365
        %v566 = vpop.f32.mrb[0].mxu0
        %v567 = vadd.f32 0.0, %v566
        %v568 = vpop.f32.mrb[0].mxu0
        %569 = vmatprep.mubr.f32.mxu0 0.0
        %570 = vmatmul.mubr.f32.gmra.mrb[0].mxu0 %v368
        %v571 = vpop.f32.mrb[0].mxu0
        %v572 = vadd.f32 0.0, %v571
        %v573 = vpop.f32.mrb[0].mxu0
        %574 = vmatprep.mubr.f32.mxu0 0.0
        %575 = vmatmul.mubr.f32.gmra.mrb[0].mxu0 %v371
        %v576 = vpop.f32.mrb[0].mxu0
        %v577 = vadd.f32 0.0, %v576
        %v578 = vpop.f32.mrb[0].mxu0
        %579 = vmatprep.mubr.f32.mxu0 0.0
        %580 = vmatmul.mubr.f32.gmra.mrb[0].mxu0 %v374
        %v581 = vpop.f32.mrb[0].mxu0
        %v582 = vadd.f32 0.0, %v581
        %v583 = vpop.f32.mrb[0].mxu0
        %584 = vmatprep.mubr.f32.mxu0 0.0
        %585 = vmatmul.mubr.f32.gmra.mrb[0].mxu0 %v377
        %v586 = vpop.f32.mrb[0].mxu0
        %v587 = vadd.f32 0.0, %v586
        %v588 = vpop.f32.mrb[0].mxu0
        %589 = vmatprep.mubr.f32.mxu0 0.0
        %590 = vmatmul.mubr.f32.gmra.mrb[0].mxu0 %v380
        %v591 = vpop.f32.mrb[0].mxu0
        %v592 = vadd.f32 0.0, %v591
        %v593 = vpop.f32.mrb[0].mxu0
        %594 = vmatprep.mubr.f32.mxu0 0.0
        %595 = vmatmul.mubr.f32.gmra.mrb[0].mxu0 %v383
        %v596 = vpop.f32.mrb[0].mxu0
        %v597 = vadd.f32 0.0, %v596
        %v598 = vpop.f32.mrb[0].mxu0
        %599 = vmatprep.mubr.f32.mxu0 0.0
        %600 = vmatmul.mubr.f32.gmra.mrb[0].mxu0 %v386
        %v601 = vpop.f32.mrb[0].mxu0
        %v602 = vadd.f32 0.0, %v601
        %v603 = vpop.f32.mrb[0].mxu0
        %604 = vmatprep.mubr.f32.mxu0 0.0
        %605 = vmatmul.mubr.f32.gmra.mrb[0].mxu0 %v389
        %v606 = vpop.f32.mrb[0].mxu0
        %v607 = vadd.f32 0.0, %v606
        %v608 = vpop.f32.mrb[0].mxu0
        %609 = vmatprep.mubr.f32.mxu0 0.0
        %610 = vmatmul.mubr.f32.gmra.mrb[0].mxu0 %v392
        %v611 = vpop.f32.mrb[0].mxu0
        %v612 = vadd.f32 0.0, %v611
        %v613 = vpop.f32.mrb[0].mxu0
        %614 = vmatprep.mubr.f32.mxu0 0.0
        %615 = vmatmul.mubr.f32.gmra.mrb[0].mxu0 %v395
        %v616 = vpop.f32.mrb[0].mxu0
        %v617 = vadd.f32 0.0, %v616
        %v618 = vpop.f32.mrb[0].mxu0
        %619 = vmatprep.mubr.f32.mxu0 0.0
        %620 = vmatmul.mubr.f32.gmra.mrb[0].mxu0 %v398
        %v621 = vpop.f32.mrb[0].mxu0
        %v622 = vadd.f32 0.0, %v621
        %v623 = vpop.f32.mrb[0].mxu0
        %624 = vdwg.mxu0
        %v625 = vld [vmem:[%s2] sm:$0x1]
        %v627 = vlaneseq
        %v628 = vshrl.u32 %v627, 7
        %v629 = vsub.s32 0, %v628
        %v630 = vrot.slane %v625, %v629
        %v632 = vsub.f32 %v630, %v467
        %v633 = vsub.f32 %v630, %v472
        %v634 = vsub.f32 %v630, %v477
        %v635 = vsub.f32 %v630, %v482
        %v636 = vsub.f32 %v630, %v487
        %v637 = vsub.f32 %v630, %v492
        %v638 = vsub.f32 %v630, %v497
        %v639 = vsub.f32 %v630, %v502
        %v640 = vsub.f32 %v630, %v507
        %v641 = vsub.f32 %v630, %v512
        %v642 = vsub.f32 %v630, %v517
        %v643 = vsub.f32 %v630, %v522
        %v644 = vsub.f32 %v630, %v527
        %v645 = vsub.f32 %v630, %v532
        %v646 = vsub.f32 %v630, %v537
        %v647 = vsub.f32 %v630, %v542
        %v648 = vsub.f32 %v630, %v547
        %v649 = vsub.f32 %v630, %v552
        %v650 = vsub.f32 %v630, %v557
        %v651 = vsub.f32 %v630, %v562
        %v652 = vsub.f32 %v630, %v567
        %v653 = vsub.f32 %v630, %v572
        %v654 = vsub.f32 %v630, %v577
        %v655 = vsub.f32 %v630, %v582
        %v656 = vsub.f32 %v630, %v587
        %v657 = vsub.f32 %v630, %v592
        %v658 = vsub.f32 %v630, %v597
        %v659 = vsub.f32 %v630, %v602
        %v660 = vsub.f32 %v630, %v607
        %v661 = vsub.f32 %v630, %v612
        %v662 = vsub.f32 %v630, %v617
        %v663 = vsub.f32 %v630, %v622
        %v664 = vlaneseq
        %v665 = vand.u32 %v664, 127
        %666 = vmin.xlane.f32.xlu0 %v632
        %v667 = vpop.xlane.xlu0 %666
        %668 = vmin.xlane.f32.xlu0 %v633
        %v669 = vpop.xlane.xlu0 %668
        %670 = vmin.xlane.f32.xlu0 %v634
        %v671 = vpop.xlane.xlu0 %670
        %672 = vmin.xlane.f32.xlu0 %v635
        %v673 = vpop.xlane.xlu0 %672
        %674 = vmin.xlane.f32.xlu0 %v636
        %v675 = vpop.xlane.xlu0 %674
        %676 = vmin.xlane.f32.xlu0 %v637
        %v677 = vpop.xlane.xlu0 %676
        %678 = vmin.xlane.f32.xlu0 %v638
        %v679 = vpop.xlane.xlu0 %678
        %680 = vmin.xlane.f32.xlu0 %v639
        %v681 = vpop.xlane.xlu0 %680
        %682 = vmin.xlane.f32.xlu0 %v640
        %v683 = vpop.xlane.xlu0 %682
        %684 = vmin.xlane.f32.xlu0 %v641
        %v685 = vpop.xlane.xlu0 %684
        %686 = vmin.xlane.f32.xlu0 %v642
        %v687 = vpop.xlane.xlu0 %686
        %688 = vmin.xlane.f32.xlu0 %v643
        %v689 = vpop.xlane.xlu0 %688
        %690 = vmin.xlane.f32.xlu0 %v644
        %v691 = vpop.xlane.xlu0 %690
        %692 = vmin.xlane.f32.xlu0 %v645
        %v693 = vpop.xlane.xlu0 %692
        %694 = vmin.xlane.f32.xlu0 %v646
        %v695 = vpop.xlane.xlu0 %694
        %696 = vmin.xlane.f32.xlu0 %v647
        %v697 = vpop.xlane.xlu0 %696
        %698 = vmin.xlane.f32.xlu0 %v648
        %v699 = vpop.xlane.xlu0 %698
        %700 = vmin.xlane.f32.xlu0 %v649
        %v701 = vpop.xlane.xlu0 %700
        %702 = vmin.xlane.f32.xlu0 %v650
        %v703 = vpop.xlane.xlu0 %702
        %704 = vmin.xlane.f32.xlu0 %v651
        %v705 = vpop.xlane.xlu0 %704
        %706 = vmin.xlane.f32.xlu0 %v652
        %v707 = vpop.xlane.xlu0 %706
        %708 = vmin.xlane.f32.xlu0 %v653
        %v709 = vpop.xlane.xlu0 %708
        %710 = vmin.xlane.f32.xlu0 %v654
        %v711 = vpop.xlane.xlu0 %710
        %712 = vmin.xlane.f32.xlu0 %v655
        %v713 = vpop.xlane.xlu0 %712
        %714 = vmin.xlane.f32.xlu0 %v656
        %v715 = vpop.xlane.xlu0 %714
        %716 = vmin.xlane.f32.xlu0 %v657
        %v717 = vpop.xlane.xlu0 %716
        %718 = vmin.xlane.f32.xlu0 %v658
        %v719 = vpop.xlane.xlu0 %718
        %720 = vmin.xlane.f32.xlu0 %v659
        %v721 = vpop.xlane.xlu0 %720
        %722 = vmin.xlane.f32.xlu0 %v660
        %v723 = vpop.xlane.xlu0 %722
        %724 = vmin.xlane.f32.xlu0 %v661
        %v725 = vpop.xlane.xlu0 %724
        %726 = vmin.xlane.f32.xlu0 %v662
        %v727 = vpop.xlane.xlu0 %726
        %728 = vmin.xlane.f32.xlu0 %v663
        %v729 = vpop.xlane.xlu0 %728
        %vm730 = vcmp.eq.f32.partialorder %v632, %v667
        %vm731 = vcmp.eq.f32.partialorder %v633, %v669
        %vm732 = vcmp.eq.f32.partialorder %v634, %v671
        %vm733 = vcmp.eq.f32.partialorder %v635, %v673
        %vm734 = vcmp.eq.f32.partialorder %v636, %v675
        %vm735 = vcmp.eq.f32.partialorder %v637, %v677
        %vm736 = vcmp.eq.f32.partialorder %v638, %v679
        %vm737 = vcmp.eq.f32.partialorder %v639, %v681
        %vm738 = vcmp.eq.f32.partialorder %v640, %v683
        %vm739 = vcmp.eq.f32.partialorder %v641, %v685
        %vm740 = vcmp.eq.f32.partialorder %v642, %v687
        %vm741 = vcmp.eq.f32.partialorder %v643, %v689
        %vm742 = vcmp.eq.f32.partialorder %v644, %v691
        %vm743 = vcmp.eq.f32.partialorder %v645, %v693
        %vm744 = vcmp.eq.f32.partialorder %v646, %v695
        %vm745 = vcmp.eq.f32.partialorder %v647, %v697
        %vm746 = vcmp.eq.f32.partialorder %v648, %v699
        %vm747 = vcmp.eq.f32.partialorder %v649, %v701
        %vm748 = vcmp.eq.f32.partialorder %v650, %v703
        %vm749 = vcmp.eq.f32.partialorder %v651, %v705
        %vm750 = vcmp.eq.f32.partialorder %v652, %v707
        %vm751 = vcmp.eq.f32.partialorder %v653, %v709
        %vm752 = vcmp.eq.f32.partialorder %v654, %v711
        %vm753 = vcmp.eq.f32.partialorder %v655, %v713
        %vm754 = vcmp.eq.f32.partialorder %v656, %v715
        %vm755 = vcmp.eq.f32.partialorder %v657, %v717
        %vm756 = vcmp.eq.f32.partialorder %v658, %v719
        %vm757 = vcmp.eq.f32.partialorder %v659, %v721
        %vm758 = vcmp.eq.f32.partialorder %v660, %v723
        %vm759 = vcmp.eq.f32.partialorder %v661, %v725
        %vm760 = vcmp.eq.f32.partialorder %v662, %v727
        %vm761 = vcmp.eq.f32.partialorder %v663, %v729
        %v762 = vsel %vm730, %v665, 128
        %v763 = vsel %vm731, %v665, 128
        %v764 = vsel %vm732, %v665, 128
        %v765 = vsel %vm733, %v665, 128
        %v766 = vsel %vm734, %v665, 128
        %v767 = vsel %vm735, %v665, 128
        %v768 = vsel %vm736, %v665, 128
        %v769 = vsel %vm737, %v665, 128
        %v770 = vsel %vm738, %v665, 128
        %v771 = vsel %vm739, %v665, 128
        %v772 = vsel %vm740, %v665, 128
        %v773 = vsel %vm741, %v665, 128
        %v774 = vsel %vm742, %v665, 128
        %v775 = vsel %vm743, %v665, 128
        %v776 = vsel %vm744, %v665, 128
        %v777 = vsel %vm745, %v665, 128
        %v778 = vsel %vm746, %v665, 128
        %v779 = vsel %vm747, %v665, 128
        %v780 = vsel %vm748, %v665, 128
        %v781 = vsel %vm749, %v665, 128
        %v782 = vsel %vm750, %v665, 128
        %v783 = vsel %vm751, %v665, 128
        %v784 = vsel %vm752, %v665, 128
        %v785 = vsel %vm753, %v665, 128
        %v786 = vsel %vm754, %v665, 128
        %v787 = vsel %vm755, %v665, 128
        %v788 = vsel %vm756, %v665, 128
        %v789 = vsel %vm757, %v665, 128
        %v790 = vsel %vm758, %v665, 128
        %v791 = vsel %vm759, %v665, 128
        %v792 = vsel %vm760, %v665, 128
        %v793 = vsel %vm761, %v665, 128
        %v794 = vand.u32 %v762, 65535
        %v795 = vshra.s32 %v762, 16
        %v796 = vcvt.s32.f32 %v794
        %v797 = vcvt.s32.f32 %v795
        %798 = vmin.xlane.f32.xlu0 %v797
        %v799 = vpop.xlane.xlu0 %798
        %vm800 = vcmp.eq.f32.partialorder %v797, %v799
        %v801 = vsel %vm800, %v796, inf
        %802 = vmin.xlane.f32.xlu0 %v801
        %v803 = vpop.xlane.xlu0 %802
        %v804 = vcvt.f32.s32 %v803
        %v805 = vcvt.f32.s32 %v799
        %v806 = vshll.u32 %v805, 16
        %v807 = vadd.s32 %v806, %v804
        %v808 = vand.u32 %v763, 65535
        %v809 = vshra.s32 %v763, 16
        %v810 = vcvt.s32.f32 %v808
        %v811 = vcvt.s32.f32 %v809
        %812 = vmin.xlane.f32.xlu0 %v811
        %v813 = vpop.xlane.xlu0 %812
        %vm814 = vcmp.eq.f32.partialorder %v811, %v813
        %v815 = vsel %vm814, %v810, inf
        %816 = vmin.xlane.f32.xlu0 %v815
        %v817 = vpop.xlane.xlu0 %816
        %v818 = vcvt.f32.s32 %v817
        %v819 = vcvt.f32.s32 %v813
        %v820 = vshll.u32 %v819, 16
        %v821 = vadd.s32 %v820, %v818
        %v822 = vand.u32 %v764, 65535
        %v823 = vshra.s32 %v764, 16
        %v824 = vcvt.s32.f32 %v822
        %v825 = vcvt.s32.f32 %v823
        %826 = vmin.xlane.f32.xlu0 %v825
        %v827 = vpop.xlane.xlu0 %826
        %vm828 = vcmp.eq.f32.partialorder %v825, %v827
        %v829 = vsel %vm828, %v824, inf
        %830 = vmin.xlane.f32.xlu0 %v829
        %v831 = vpop.xlane.xlu0 %830
        %v832 = vcvt.f32.s32 %v831
        %v833 = vcvt.f32.s32 %v827
        %v834 = vshll.u32 %v833, 16
        %v835 = vadd.s32 %v834, %v832
        %v836 = vand.u32 %v765, 65535
        %v837 = vshra.s32 %v765, 16
        %v838 = vcvt.s32.f32 %v836
        %v839 = vcvt.s32.f32 %v837
        %840 = vmin.xlane.f32.xlu0 %v839
        %v841 = vpop.xlane.xlu0 %840
        %vm842 = vcmp.eq.f32.partialorder %v839, %v841
        %v843 = vsel %vm842, %v838, inf
        %844 = vmin.xlane.f32.xlu0 %v843
        %v845 = vpop.xlane.xlu0 %844
        %v846 = vcvt.f32.s32 %v845
        %v847 = vcvt.f32.s32 %v841
        %v848 = vshll.u32 %v847, 16
        %v849 = vadd.s32 %v848, %v846
        %v850 = vand.u32 %v766, 65535
        %v851 = vshra.s32 %v766, 16
        %v852 = vcvt.s32.f32 %v850
        %v853 = vcvt.s32.f32 %v851
        %854 = vmin.xlane.f32.xlu0 %v853
        %v855 = vpop.xlane.xlu0 %854
        %vm856 = vcmp.eq.f32.partialorder %v853, %v855
        %v857 = vsel %vm856, %v852, inf
        %858 = vmin.xlane.f32.xlu0 %v857
        %v859 = vpop.xlane.xlu0 %858
        %v860 = vcvt.f32.s32 %v859
        %v861 = vcvt.f32.s32 %v855
        %v862 = vshll.u32 %v861, 16
        %v863 = vadd.s32 %v862, %v860
        %v864 = vand.u32 %v767, 65535
        %v865 = vshra.s32 %v767, 16
        %v866 = vcvt.s32.f32 %v864
        %v867 = vcvt.s32.f32 %v865
        %868 = vmin.xlane.f32.xlu0 %v867
        %v869 = vpop.xlane.xlu0 %868
        %vm870 = vcmp.eq.f32.partialorder %v867, %v869
        %v871 = vsel %vm870, %v866, inf
        %872 = vmin.xlane.f32.xlu0 %v871
        %v873 = vpop.xlane.xlu0 %872
        %v874 = vcvt.f32.s32 %v873
        %v875 = vcvt.f32.s32 %v869
        %v876 = vshll.u32 %v875, 16
        %v877 = vadd.s32 %v876, %v874
        %v878 = vand.u32 %v768, 65535
        %v879 = vshra.s32 %v768, 16
        %v880 = vcvt.s32.f32 %v878
        %v881 = vcvt.s32.f32 %v879
        %882 = vmin.xlane.f32.xlu0 %v881
        %v883 = vpop.xlane.xlu0 %882
        %vm884 = vcmp.eq.f32.partialorder %v881, %v883
        %v885 = vsel %vm884, %v880, inf
        %886 = vmin.xlane.f32.xlu0 %v885
        %v887 = vpop.xlane.xlu0 %886
        %v888 = vcvt.f32.s32 %v887
        %v889 = vcvt.f32.s32 %v883
        %v890 = vshll.u32 %v889, 16
        %v891 = vadd.s32 %v890, %v888
        %v892 = vand.u32 %v769, 65535
        %v893 = vshra.s32 %v769, 16
        %v894 = vcvt.s32.f32 %v892
        %v895 = vcvt.s32.f32 %v893
        %896 = vmin.xlane.f32.xlu0 %v895
        %v897 = vpop.xlane.xlu0 %896
        %vm898 = vcmp.eq.f32.partialorder %v895, %v897
        %v899 = vsel %vm898, %v894, inf
        %900 = vmin.xlane.f32.xlu0 %v899
        %v901 = vpop.xlane.xlu0 %900
        %v902 = vcvt.f32.s32 %v901
        %v903 = vcvt.f32.s32 %v897
        %v904 = vshll.u32 %v903, 16
        %v905 = vadd.s32 %v904, %v902
        %v906 = vand.u32 %v770, 65535
        %v907 = vshra.s32 %v770, 16
        %v908 = vcvt.s32.f32 %v906
        %v909 = vcvt.s32.f32 %v907
        %910 = vmin.xlane.f32.xlu0 %v909
        %v911 = vpop.xlane.xlu0 %910
        %vm912 = vcmp.eq.f32.partialorder %v909, %v911
        %v913 = vsel %vm912, %v908, inf
        %914 = vmin.xlane.f32.xlu0 %v913
        %v915 = vpop.xlane.xlu0 %914
        %v916 = vcvt.f32.s32 %v915
        %v917 = vcvt.f32.s32 %v911
        %v918 = vshll.u32 %v917, 16
        %v919 = vadd.s32 %v918, %v916
        %v920 = vand.u32 %v771, 65535
        %v921 = vshra.s32 %v771, 16
        %v922 = vcvt.s32.f32 %v920
        %v923 = vcvt.s32.f32 %v921
        %924 = vmin.xlane.f32.xlu0 %v923
        %v925 = vpop.xlane.xlu0 %924
        %vm926 = vcmp.eq.f32.partialorder %v923, %v925
        %v927 = vsel %vm926, %v922, inf
        %928 = vmin.xlane.f32.xlu0 %v927
        %v929 = vpop.xlane.xlu0 %928
        %v930 = vcvt.f32.s32 %v929
        %v931 = vcvt.f32.s32 %v925
        %v932 = vshll.u32 %v931, 16
        %v933 = vadd.s32 %v932, %v930
        %v934 = vand.u32 %v772, 65535
        %v935 = vshra.s32 %v772, 16
        %v936 = vcvt.s32.f32 %v934
        %v937 = vcvt.s32.f32 %v935
        %938 = vmin.xlane.f32.xlu0 %v937
        %v939 = vpop.xlane.xlu0 %938
        %vm940 = vcmp.eq.f32.partialorder %v937, %v939
        %v941 = vsel %vm940, %v936, inf
        %942 = vmin.xlane.f32.xlu0 %v941
        %v943 = vpop.xlane.xlu0 %942
        %v944 = vcvt.f32.s32 %v943
        %v945 = vcvt.f32.s32 %v939
        %v946 = vshll.u32 %v945, 16
        %v947 = vadd.s32 %v946, %v944
        %v948 = vand.u32 %v773, 65535
        %v949 = vshra.s32 %v773, 16
        %v950 = vcvt.s32.f32 %v948
        %v951 = vcvt.s32.f32 %v949
        %952 = vmin.xlane.f32.xlu0 %v951
        %v953 = vpop.xlane.xlu0 %952
        %vm954 = vcmp.eq.f32.partialorder %v951, %v953
        %v955 = vsel %vm954, %v950, inf
        %956 = vmin.xlane.f32.xlu0 %v955
        %v957 = vpop.xlane.xlu0 %956
        %v958 = vcvt.f32.s32 %v957
        %v959 = vcvt.f32.s32 %v953
        %v960 = vshll.u32 %v959, 16
        %v961 = vadd.s32 %v960, %v958
        %v962 = vand.u32 %v774, 65535
        %v963 = vshra.s32 %v774, 16
        %v964 = vcvt.s32.f32 %v962
        %v965 = vcvt.s32.f32 %v963
        %966 = vmin.xlane.f32.xlu0 %v965
        %v967 = vpop.xlane.xlu0 %966
        %vm968 = vcmp.eq.f32.partialorder %v965, %v967
        %v969 = vsel %vm968, %v964, inf
        %970 = vmin.xlane.f32.xlu0 %v969
        %v971 = vpop.xlane.xlu0 %970
        %v972 = vcvt.f32.s32 %v971
        %v973 = vcvt.f32.s32 %v967
        %v974 = vshll.u32 %v973, 16
        %v975 = vadd.s32 %v974, %v972
        %v976 = vand.u32 %v775, 65535
        %v977 = vshra.s32 %v775, 16
        %v978 = vcvt.s32.f32 %v976
        %v979 = vcvt.s32.f32 %v977
        %980 = vmin.xlane.f32.xlu0 %v979
        %v981 = vpop.xlane.xlu0 %980
        %vm982 = vcmp.eq.f32.partialorder %v979, %v981
        %v983 = vsel %vm982, %v978, inf
        %984 = vmin.xlane.f32.xlu0 %v983
        %v985 = vpop.xlane.xlu0 %984
        %v986 = vcvt.f32.s32 %v985
        %v987 = vcvt.f32.s32 %v981
        %v988 = vshll.u32 %v987, 16
        %v989 = vadd.s32 %v988, %v986
        %v990 = vand.u32 %v776, 65535
        %v991 = vshra.s32 %v776, 16
        %v992 = vcvt.s32.f32 %v990
        %v993 = vcvt.s32.f32 %v991
        %994 = vmin.xlane.f32.xlu0 %v993
        %v995 = vpop.xlane.xlu0 %994
        %vm996 = vcmp.eq.f32.partialorder %v993, %v995
        %v997 = vsel %vm996, %v992, inf
        %998 = vmin.xlane.f32.xlu0 %v997
        %v999 = vpop.xlane.xlu0 %998
        %v1000 = vcvt.f32.s32 %v999
        %v1001 = vcvt.f32.s32 %v995
        %v1002 = vshll.u32 %v1001, 16
        %v1003 = vadd.s32 %v1002, %v1000
        %v1004 = vand.u32 %v777, 65535
        %v1005 = vshra.s32 %v777, 16
        %v1006 = vcvt.s32.f32 %v1004
        %v1007 = vcvt.s32.f32 %v1005
        %1008 = vmin.xlane.f32.xlu0 %v1007
        %v1009 = vpop.xlane.xlu0 %1008
        %vm1010 = vcmp.eq.f32.partialorder %v1007, %v1009
        %v1011 = vsel %vm1010, %v1006, inf
        %1012 = vmin.xlane.f32.xlu0 %v1011
        %v1013 = vpop.xlane.xlu0 %1012
        %v1014 = vcvt.f32.s32 %v1013
        %v1015 = vcvt.f32.s32 %v1009
        %v1016 = vshll.u32 %v1015, 16
        %v1017 = vadd.s32 %v1016, %v1014
        %v1018 = vand.u32 %v778, 65535
        %v1019 = vshra.s32 %v778, 16
        %v1020 = vcvt.s32.f32 %v1018
        %v1021 = vcvt.s32.f32 %v1019
        %1022 = vmin.xlane.f32.xlu0 %v1021
        %v1023 = vpop.xlane.xlu0 %1022
        %vm1024 = vcmp.eq.f32.partialorder %v1021, %v1023
        %v1025 = vsel %vm1024, %v1020, inf
        %1026 = vmin.xlane.f32.xlu0 %v1025
        %v1027 = vpop.xlane.xlu0 %1026
        %v1028 = vcvt.f32.s32 %v1027
        %v1029 = vcvt.f32.s32 %v1023
        %v1030 = vshll.u32 %v1029, 16
        %v1031 = vadd.s32 %v1030, %v1028
        %v1032 = vand.u32 %v779, 65535
        %v1033 = vshra.s32 %v779, 16
        %v1034 = vcvt.s32.f32 %v1032
        %v1035 = vcvt.s32.f32 %v1033
        %1036 = vmin.xlane.f32.xlu0 %v1035
        %v1037 = vpop.xlane.xlu0 %1036
        %vm1038 = vcmp.eq.f32.partialorder %v1035, %v1037
        %v1039 = vsel %vm1038, %v1034, inf
        %1040 = vmin.xlane.f32.xlu0 %v1039
        %v1041 = vpop.xlane.xlu0 %1040
        %v1042 = vcvt.f32.s32 %v1041
        %v1043 = vcvt.f32.s32 %v1037
        %v1044 = vshll.u32 %v1043, 16
        %v1045 = vadd.s32 %v1044, %v1042
        %v1046 = vand.u32 %v780, 65535
        %v1047 = vshra.s32 %v780, 16
        %v1048 = vcvt.s32.f32 %v1046
        %v1049 = vcvt.s32.f32 %v1047
        %1050 = vmin.xlane.f32.xlu0 %v1049
        %v1051 = vpop.xlane.xlu0 %1050
        %vm1052 = vcmp.eq.f32.partialorder %v1049, %v1051
        %v1053 = vsel %vm1052, %v1048, inf
        %1054 = vmin.xlane.f32.xlu0 %v1053
        %v1055 = vpop.xlane.xlu0 %1054
        %v1056 = vcvt.f32.s32 %v1055
        %v1057 = vcvt.f32.s32 %v1051
        %v1058 = vshll.u32 %v1057, 16
        %v1059 = vadd.s32 %v1058, %v1056
        %v1060 = vand.u32 %v781, 65535
        %v1061 = vshra.s32 %v781, 16
        %v1062 = vcvt.s32.f32 %v1060
        %v1063 = vcvt.s32.f32 %v1061
        %1064 = vmin.xlane.f32.xlu0 %v1063
        %v1065 = vpop.xlane.xlu0 %1064
        %vm1066 = vcmp.eq.f32.partialorder %v1063, %v1065
        %v1067 = vsel %vm1066, %v1062, inf
        %1068 = vmin.xlane.f32.xlu0 %v1067
        %v1069 = vpop.xlane.xlu0 %1068
        %v1070 = vcvt.f32.s32 %v1069
        %v1071 = vcvt.f32.s32 %v1065
        %v1072 = vshll.u32 %v1071, 16
        %v1073 = vadd.s32 %v1072, %v1070
        %v1074 = vand.u32 %v782, 65535
        %v1075 = vshra.s32 %v782, 16
        %v1076 = vcvt.s32.f32 %v1074
        %v1077 = vcvt.s32.f32 %v1075
        %1078 = vmin.xlane.f32.xlu0 %v1077
        %v1079 = vpop.xlane.xlu0 %1078
        %vm1080 = vcmp.eq.f32.partialorder %v1077, %v1079
        %v1081 = vsel %vm1080, %v1076, inf
        %1082 = vmin.xlane.f32.xlu0 %v1081
        %v1083 = vpop.xlane.xlu0 %1082
        %v1084 = vcvt.f32.s32 %v1083
        %v1085 = vcvt.f32.s32 %v1079
        %v1086 = vshll.u32 %v1085, 16
        %v1087 = vadd.s32 %v1086, %v1084
        %v1088 = vand.u32 %v783, 65535
        %v1089 = vshra.s32 %v783, 16
        %v1090 = vcvt.s32.f32 %v1088
        %v1091 = vcvt.s32.f32 %v1089
        %1092 = vmin.xlane.f32.xlu0 %v1091
        %v1093 = vpop.xlane.xlu0 %1092
        %vm1094 = vcmp.eq.f32.partialorder %v1091, %v1093
        %v1095 = vsel %vm1094, %v1090, inf
        %1096 = vmin.xlane.f32.xlu0 %v1095
        %v1097 = vpop.xlane.xlu0 %1096
        %v1098 = vcvt.f32.s32 %v1097
        %v1099 = vcvt.f32.s32 %v1093
        %v1100 = vshll.u32 %v1099, 16
        %v1101 = vadd.s32 %v1100, %v1098
        %v1102 = vand.u32 %v784, 65535
        %v1103 = vshra.s32 %v784, 16
        %v1104 = vcvt.s32.f32 %v1102
        %v1105 = vcvt.s32.f32 %v1103
        %1106 = vmin.xlane.f32.xlu0 %v1105
        %v1107 = vpop.xlane.xlu0 %1106
        %vm1108 = vcmp.eq.f32.partialorder %v1105, %v1107
        %v1109 = vsel %vm1108, %v1104, inf
        %1110 = vmin.xlane.f32.xlu0 %v1109
        %v1111 = vpop.xlane.xlu0 %1110
        %v1112 = vcvt.f32.s32 %v1111
        %v1113 = vcvt.f32.s32 %v1107
        %v1114 = vshll.u32 %v1113, 16
        %v1115 = vadd.s32 %v1114, %v1112
        %v1116 = vand.u32 %v785, 65535
        %v1117 = vshra.s32 %v785, 16
        %v1118 = vcvt.s32.f32 %v1116
        %v1119 = vcvt.s32.f32 %v1117
        %1120 = vmin.xlane.f32.xlu0 %v1119
        %v1121 = vpop.xlane.xlu0 %1120
        %vm1122 = vcmp.eq.f32.partialorder %v1119, %v1121
        %v1123 = vsel %vm1122, %v1118, inf
        %1124 = vmin.xlane.f32.xlu0 %v1123
        %v1125 = vpop.xlane.xlu0 %1124
        %v1126 = vcvt.f32.s32 %v1125
        %v1127 = vcvt.f32.s32 %v1121
        %v1128 = vshll.u32 %v1127, 16
        %v1129 = vadd.s32 %v1128, %v1126
        %v1130 = vand.u32 %v786, 65535
        %v1131 = vshra.s32 %v786, 16
        %v1132 = vcvt.s32.f32 %v1130
        %v1133 = vcvt.s32.f32 %v1131
        %1134 = vmin.xlane.f32.xlu0 %v1133
        %v1135 = vpop.xlane.xlu0 %1134
        %vm1136 = vcmp.eq.f32.partialorder %v1133, %v1135
        %v1137 = vsel %vm1136, %v1132, inf
        %1138 = vmin.xlane.f32.xlu0 %v1137
        %v1139 = vpop.xlane.xlu0 %1138
        %v1140 = vcvt.f32.s32 %v1139
        %v1141 = vcvt.f32.s32 %v1135
        %v1142 = vshll.u32 %v1141, 16
        %v1143 = vadd.s32 %v1142, %v1140
        %v1144 = vand.u32 %v787, 65535
        %v1145 = vshra.s32 %v787, 16
        %v1146 = vcvt.s32.f32 %v1144
        %v1147 = vcvt.s32.f32 %v1145
        %1148 = vmin.xlane.f32.xlu0 %v1147
        %v1149 = vpop.xlane.xlu0 %1148
        %vm1150 = vcmp.eq.f32.partialorder %v1147, %v1149
        %v1151 = vsel %vm1150, %v1146, inf
        %1152 = vmin.xlane.f32.xlu0 %v1151
        %v1153 = vpop.xlane.xlu0 %1152
        %v1154 = vcvt.f32.s32 %v1153
        %v1155 = vcvt.f32.s32 %v1149
        %v1156 = vshll.u32 %v1155, 16
        %v1157 = vadd.s32 %v1156, %v1154
        %v1158 = vand.u32 %v788, 65535
        %v1159 = vshra.s32 %v788, 16
        %v1160 = vcvt.s32.f32 %v1158
        %v1161 = vcvt.s32.f32 %v1159
        %1162 = vmin.xlane.f32.xlu0 %v1161
        %v1163 = vpop.xlane.xlu0 %1162
        %vm1164 = vcmp.eq.f32.partialorder %v1161, %v1163
        %v1165 = vsel %vm1164, %v1160, inf
        %1166 = vmin.xlane.f32.xlu0 %v1165
        %v1167 = vpop.xlane.xlu0 %1166
        %v1168 = vcvt.f32.s32 %v1167
        %v1169 = vcvt.f32.s32 %v1163
        %v1170 = vshll.u32 %v1169, 16
        %v1171 = vadd.s32 %v1170, %v1168
        %v1172 = vand.u32 %v789, 65535
        %v1173 = vshra.s32 %v789, 16
        %v1174 = vcvt.s32.f32 %v1172
        %v1175 = vcvt.s32.f32 %v1173
        %1176 = vmin.xlane.f32.xlu0 %v1175
        %v1177 = vpop.xlane.xlu0 %1176
        %vm1178 = vcmp.eq.f32.partialorder %v1175, %v1177
        %v1179 = vsel %vm1178, %v1174, inf
        %1180 = vmin.xlane.f32.xlu0 %v1179
        %v1181 = vpop.xlane.xlu0 %1180
        %v1182 = vcvt.f32.s32 %v1181
        %v1183 = vcvt.f32.s32 %v1177
        %v1184 = vshll.u32 %v1183, 16
        %v1185 = vadd.s32 %v1184, %v1182
        %v1186 = vand.u32 %v790, 65535
        %v1187 = vshra.s32 %v790, 16
        %v1188 = vcvt.s32.f32 %v1186
        %v1189 = vcvt.s32.f32 %v1187
        %1190 = vmin.xlane.f32.xlu0 %v1189
        %v1191 = vpop.xlane.xlu0 %1190
        %vm1192 = vcmp.eq.f32.partialorder %v1189, %v1191
        %v1193 = vsel %vm1192, %v1188, inf
        %1194 = vmin.xlane.f32.xlu0 %v1193
        %v1195 = vpop.xlane.xlu0 %1194
        %v1196 = vcvt.f32.s32 %v1195
        %v1197 = vcvt.f32.s32 %v1191
        %v1198 = vshll.u32 %v1197, 16
        %v1199 = vadd.s32 %v1198, %v1196
        %v1200 = vand.u32 %v791, 65535
        %v1201 = vshra.s32 %v791, 16
        %v1202 = vcvt.s32.f32 %v1200
        %v1203 = vcvt.s32.f32 %v1201
        %1204 = vmin.xlane.f32.xlu0 %v1203
        %v1205 = vpop.xlane.xlu0 %1204
        %vm1206 = vcmp.eq.f32.partialorder %v1203, %v1205
        %v1207 = vsel %vm1206, %v1202, inf
        %1208 = vmin.xlane.f32.xlu0 %v1207
        %v1209 = vpop.xlane.xlu0 %1208
        %v1210 = vcvt.f32.s32 %v1209
        %v1211 = vcvt.f32.s32 %v1205
        %v1212 = vshll.u32 %v1211, 16
        %v1213 = vadd.s32 %v1212, %v1210
        %v1214 = vand.u32 %v792, 65535
        %v1215 = vshra.s32 %v792, 16
        %v1216 = vcvt.s32.f32 %v1214
        %v1217 = vcvt.s32.f32 %v1215
        %1218 = vmin.xlane.f32.xlu0 %v1217
        %v1219 = vpop.xlane.xlu0 %1218
        %vm1220 = vcmp.eq.f32.partialorder %v1217, %v1219
        %v1221 = vsel %vm1220, %v1216, inf
        %1222 = vmin.xlane.f32.xlu0 %v1221
        %v1223 = vpop.xlane.xlu0 %1222
        %v1224 = vcvt.f32.s32 %v1223
        %v1225 = vcvt.f32.s32 %v1219
        %v1226 = vshll.u32 %v1225, 16
        %v1227 = vadd.s32 %v1226, %v1224
        %v1228 = vand.u32 %v793, 65535
        %v1229 = vshra.s32 %v793, 16
        %v1230 = vcvt.s32.f32 %v1228
        %v1231 = vcvt.s32.f32 %v1229
        %1232 = vmin.xlane.f32.xlu0 %v1231
        %v1233 = vpop.xlane.xlu0 %1232
        %vm1234 = vcmp.eq.f32.partialorder %v1231, %v1233
        %v1235 = vsel %vm1234, %v1230, inf
        %1236 = vmin.xlane.f32.xlu0 %v1235
        %v1237 = vpop.xlane.xlu0 %1236
        %v1238 = vcvt.f32.s32 %v1237
        %v1239 = vcvt.f32.s32 %v1233
        %v1240 = vshll.u32 %v1239, 16
        %v1241 = vadd.s32 %v1240, %v1238
        %vm1242 = vcmp.eq.s32.totalorder %v665, %v807
        %vm1243 = vcmp.eq.s32.totalorder %v665, %v821
        %vm1244 = vcmp.eq.s32.totalorder %v665, %v835
        %vm1245 = vcmp.eq.s32.totalorder %v665, %v849
        %vm1246 = vcmp.eq.s32.totalorder %v665, %v863
        %vm1247 = vcmp.eq.s32.totalorder %v665, %v877
        %vm1248 = vcmp.eq.s32.totalorder %v665, %v891
        %vm1249 = vcmp.eq.s32.totalorder %v665, %v905
        %vm1250 = vcmp.eq.s32.totalorder %v665, %v919
        %vm1251 = vcmp.eq.s32.totalorder %v665, %v933
        %vm1252 = vcmp.eq.s32.totalorder %v665, %v947
        %vm1253 = vcmp.eq.s32.totalorder %v665, %v961
        %vm1254 = vcmp.eq.s32.totalorder %v665, %v975
        %vm1255 = vcmp.eq.s32.totalorder %v665, %v989
        %vm1256 = vcmp.eq.s32.totalorder %v665, %v1003
        %vm1257 = vcmp.eq.s32.totalorder %v665, %v1017
        %vm1258 = vcmp.eq.s32.totalorder %v665, %v1031
        %vm1259 = vcmp.eq.s32.totalorder %v665, %v1045
        %vm1260 = vcmp.eq.s32.totalorder %v665, %v1059
        %vm1261 = vcmp.eq.s32.totalorder %v665, %v1073
        %vm1262 = vcmp.eq.s32.totalorder %v665, %v1087
        %vm1263 = vcmp.eq.s32.totalorder %v665, %v1101
        %vm1264 = vcmp.eq.s32.totalorder %v665, %v1115
        %vm1265 = vcmp.eq.s32.totalorder %v665, %v1129
        %vm1266 = vcmp.eq.s32.totalorder %v665, %v1143
        %vm1267 = vcmp.eq.s32.totalorder %v665, %v1157
        %vm1268 = vcmp.eq.s32.totalorder %v665, %v1171
        %vm1269 = vcmp.eq.s32.totalorder %v665, %v1185
        %vm1270 = vcmp.eq.s32.totalorder %v665, %v1199
        %vm1271 = vcmp.eq.s32.totalorder %v665, %v1213
        %vm1272 = vcmp.eq.s32.totalorder %v665, %v1227
        %vm1273 = vcmp.eq.s32.totalorder %v665, %v1241
        %v1274 = vsel %vm1242, 1, 0
        %v1275 = vsel %vm1243, 1, 0
        %v1276 = vsel %vm1244, 1, 0
        %v1277 = vsel %vm1245, 1, 0
        %v1278 = vsel %vm1246, 1, 0
        %v1279 = vsel %vm1247, 1, 0
        %v1280 = vsel %vm1248, 1, 0
        %v1281 = vsel %vm1249, 1, 0
        %v1282 = vsel %vm1250, 1, 0
        %v1283 = vsel %vm1251, 1, 0
        %v1284 = vsel %vm1252, 1, 0
        %v1285 = vsel %vm1253, 1, 0
        %v1286 = vsel %vm1254, 1, 0
        %v1287 = vsel %vm1255, 1, 0
        %v1288 = vsel %vm1256, 1, 0
        %v1289 = vsel %vm1257, 1, 0
        %v1290 = vsel %vm1258, 1, 0
        %v1291 = vsel %vm1259, 1, 0
        %v1292 = vsel %vm1260, 1, 0
        %v1293 = vsel %vm1261, 1, 0
        %v1294 = vsel %vm1262, 1, 0
        %v1295 = vsel %vm1263, 1, 0
        %v1296 = vsel %vm1264, 1, 0
        %v1297 = vsel %vm1265, 1, 0
        %v1298 = vsel %vm1266, 1, 0
        %v1299 = vsel %vm1267, 1, 0
        %v1300 = vsel %vm1268, 1, 0
        %v1301 = vsel %vm1269, 1, 0
        %v1302 = vsel %vm1270, 1, 0
        %v1303 = vsel %vm1271, 1, 0
        %v1304 = vsel %vm1272, 1, 0
        %v1305 = vsel %vm1273, 1, 0
        %v1306 = vcvt.s32.f32 %v1274
        %v1307 = vcvt.s32.f32 %v1275
        %v1308 = vcvt.s32.f32 %v1276
        %v1309 = vcvt.s32.f32 %v1277
        %v1310 = vcvt.s32.f32 %v1278
        %v1311 = vcvt.s32.f32 %v1279
        %v1312 = vcvt.s32.f32 %v1280
        %v1313 = vcvt.s32.f32 %v1281
        %v1314 = vcvt.s32.f32 %v1282
        %v1315 = vcvt.s32.f32 %v1283
        %v1316 = vcvt.s32.f32 %v1284
        %v1317 = vcvt.s32.f32 %v1285
        %v1318 = vcvt.s32.f32 %v1286
        %v1319 = vcvt.s32.f32 %v1287
        %v1320 = vcvt.s32.f32 %v1288
        %v1321 = vcvt.s32.f32 %v1289
        %v1322 = vcvt.s32.f32 %v1290
        %v1323 = vcvt.s32.f32 %v1291
        %v1324 = vcvt.s32.f32 %v1292
        %v1325 = vcvt.s32.f32 %v1293
        %v1326 = vcvt.s32.f32 %v1294
        %v1327 = vcvt.s32.f32 %v1295
        %v1328 = vcvt.s32.f32 %v1296
        %v1329 = vcvt.s32.f32 %v1297
        %v1330 = vcvt.s32.f32 %v1298
        %v1331 = vcvt.s32.f32 %v1299
        %v1332 = vcvt.s32.f32 %v1300
        %v1333 = vcvt.s32.f32 %v1301
        %v1334 = vcvt.s32.f32 %v1302
        %v1335 = vcvt.s32.f32 %v1303
        %v1336 = vcvt.s32.f32 %v1304
        %v1337 = vcvt.s32.f32 %v1305
        %1338 = vmatprep.subr.mxu0 0.0
        %1339 = vmatpush1.xpose.msra.mxu0 %v299
        %1340 = vmatprep.subr.mxu0 0.0
        %1341 = vmatpush1.xpose.msra.mxu0 %v300
        %1342 = vmatprep.subr.mxu0 0.0
        %1343 = vmatpush1.xpose.msra.mxu0 %v301
        %1344 = vmatprep.subr.mxu0 0.0
        %1345 = vmatpush1.xpose.msra.mxu0 %v302
        %1346 = vmatprep.subr.mxu0 0.0
        %1347 = vmatpush1.xpose.msra.mxu0 0.0
        %1348 = vmatprep.subr.mxu0 0.0
        %1349 = vmatpush1.xpose.msra.mxu0 0.0
        %1350 = vmatprep.subr.mxu0 0.0
        %1351 = vmatpush1.xpose.msra.mxu0 0.0
        %1352 = vmatprep.subr.mxu0 0.0
        %1353 = vmatpush1.xpose.msra.mxu0 0.0
        %1354 = vmatprep.subr.mxu0 0.0
        %1355 = vmatpush1.xpose.msra.mxu0 0.0
        %1356 = vmatprep.subr.mxu0 0.0
        %1357 = vmatpush1.xpose.msra.mxu0 0.0
        %1358 = vmatprep.subr.mxu0 0.0
        %1359 = vmatpush1.xpose.msra.mxu0 0.0
        %1360 = vmatprep.subr.mxu0 0.0
        %1361 = vmatpush1.xpose.msra.mxu0 0.0
        %1362 = vmatprep.subr.mxu0 0.0
        %1363 = vmatpush1.xpose.msra.mxu0 0.0
        %1364 = vmatprep.subr.mxu0 0.0
        %1365 = vmatpush1.xpose.msra.mxu0 0.0
        %1366 = vmatprep.subr.mxu0 0.0
        %1367 = vmatpush1.xpose.msra.mxu0 0.0
        %1368 = vmatprep.subr.mxu0 0.0
        %1369 = vmatpush1.xpose.msra.mxu0 0.0
        %1370 = vmatprep.subr.mxu0 0.0
        %1371 = vmatpush1.xpose.msra.mxu0 0.0
        %1372 = vmatprep.subr.mxu0 0.0
        %1373 = vmatpush1.xpose.msra.mxu0 0.0
        %1374 = vmatprep.subr.mxu0 0.0
        %1375 = vmatpush1.xpose.msra.mxu0 0.0
        %1376 = vmatprep.subr.mxu0 0.0
        %1377 = vmatpush1.xpose.msra.mxu0 0.0
        %1378 = vmatprep.subr.mxu0 0.0
        %1379 = vmatpush1.xpose.msra.mxu0 0.0
        %1380 = vmatprep.subr.mxu0 0.0
        %1381 = vmatpush1.xpose.msra.mxu0 0.0
        %1382 = vmatprep.subr.mxu0 0.0
        %1383 = vmatpush1.xpose.msra.mxu0 0.0
        %1384 = vmatprep.subr.mxu0 0.0
        %1385 = vmatpush1.xpose.msra.mxu0 0.0
        %1386 = vmatprep.subr.mxu0 0.0
        %1387 = vmatpush1.xpose.msra.mxu0 0.0
        %1388 = vmatprep.subr.mxu0 0.0
        %1389 = vmatpush1.xpose.msra.mxu0 0.0
        %1390 = vmatprep.subr.mxu0 0.0
        %1391 = vmatpush1.xpose.msra.mxu0 0.0
        %1392 = vmatprep.subr.mxu0 0.0
        %1393 = vmatpush1.xpose.msra.mxu0 0.0
        %1394 = vmatprep.subr.mxu0 0.0
        %1395 = vmatpush1.xpose.msra.mxu0 0.0
        %1396 = vmatprep.subr.mxu0 0.0
        %1397 = vmatpush1.xpose.msra.mxu0 0.0
        %1398 = vmatprep.subr.mxu0 0.0
        %1399 = vmatpush1.xpose.msra.mxu0 0.0
        %1400 = vmatprep.subr.mxu0 0.0
        %1401 = vmatpush1.xpose.msra.mxu0 0.0
        %1402 = vmatprep.mubr.f32.mxu0 0.0
        %1403 = vmatmul.mubr.f32.gmra.mrb[0].mxu0 %v1306
        %v1404 = vpop.f32.mrb[0].mxu0
        %v1405 = vadd.f32 0.0, %v1404
        %v1406 = vpop.f32.mrb[0].mxu0
        %1407 = vmatprep.mubr.f32.mxu0 0.0
        %1408 = vmatmul.mubr.f32.gmra.mrb[0].mxu0 %v1307
        %v1409 = vpop.f32.mrb[0].mxu0
        %v1410 = vadd.f32 0.0, %v1409
        %v1411 = vpop.f32.mrb[0].mxu0
        %1412 = vmatprep.mubr.f32.mxu0 0.0
        %1413 = vmatmul.mubr.f32.gmra.mrb[0].mxu0 %v1308
        %v1414 = vpop.f32.mrb[0].mxu0
        %v1415 = vadd.f32 0.0, %v1414
        %v1416 = vpop.f32.mrb[0].mxu0
        %1417 = vmatprep.mubr.f32.mxu0 0.0
        %1418 = vmatmul.mubr.f32.gmra.mrb[0].mxu0 %v1309
        %v1419 = vpop.f32.mrb[0].mxu0
        %v1420 = vadd.f32 0.0, %v1419
        %v1421 = vpop.f32.mrb[0].mxu0
        %1422 = vmatprep.mubr.f32.mxu0 0.0
        %1423 = vmatmul.mubr.f32.gmra.mrb[0].mxu0 %v1310
        %v1424 = vpop.f32.mrb[0].mxu0
        %v1425 = vadd.f32 0.0, %v1424
        %v1426 = vpop.f32.mrb[0].mxu0
        %1427 = vmatprep.mubr.f32.mxu0 0.0
        %1428 = vmatmul.mubr.f32.gmra.mrb[0].mxu0 %v1311
        %v1429 = vpop.f32.mrb[0].mxu0
        %v1430 = vadd.f32 0.0, %v1429
        %v1431 = vpop.f32.mrb[0].mxu0
        %1432 = vmatprep.mubr.f32.mxu0 0.0
        %1433 = vmatmul.mubr.f32.gmra.mrb[0].mxu0 %v1312
        %v1434 = vpop.f32.mrb[0].mxu0
        %v1435 = vadd.f32 0.0, %v1434
        %v1436 = vpop.f32.mrb[0].mxu0
        %1437 = vmatprep.mubr.f32.mxu0 0.0
        %1438 = vmatmul.mubr.f32.gmra.mrb[0].mxu0 %v1313
        %v1439 = vpop.f32.mrb[0].mxu0
        %v1440 = vadd.f32 0.0, %v1439
        %v1441 = vpop.f32.mrb[0].mxu0
        %1442 = vmatprep.mubr.f32.mxu0 0.0
        %1443 = vmatmul.mubr.f32.gmra.mrb[0].mxu0 %v1314
        %v1444 = vpop.f32.mrb[0].mxu0
        %v1445 = vadd.f32 0.0, %v1444
        %v1446 = vpop.f32.mrb[0].mxu0
        %1447 = vmatprep.mubr.f32.mxu0 0.0
        %1448 = vmatmul.mubr.f32.gmra.mrb[0].mxu0 %v1315
        %v1449 = vpop.f32.mrb[0].mxu0
        %v1450 = vadd.f32 0.0, %v1449
        %v1451 = vpop.f32.mrb[0].mxu0
        %1452 = vmatprep.mubr.f32.mxu0 0.0
        %1453 = vmatmul.mubr.f32.gmra.mrb[0].mxu0 %v1316
        %v1454 = vpop.f32.mrb[0].mxu0
        %v1455 = vadd.f32 0.0, %v1454
        %v1456 = vpop.f32.mrb[0].mxu0
        %1457 = vmatprep.mubr.f32.mxu0 0.0
        %1458 = vmatmul.mubr.f32.gmra.mrb[0].mxu0 %v1317
        %v1459 = vpop.f32.mrb[0].mxu0
        %v1460 = vadd.f32 0.0, %v1459
        %v1461 = vpop.f32.mrb[0].mxu0
        %1462 = vmatprep.mubr.f32.mxu0 0.0
        %1463 = vmatmul.mubr.f32.gmra.mrb[0].mxu0 %v1318
        %v1464 = vpop.f32.mrb[0].mxu0
        %v1465 = vadd.f32 0.0, %v1464
        %v1466 = vpop.f32.mrb[0].mxu0
        %1467 = vmatprep.mubr.f32.mxu0 0.0
        %1468 = vmatmul.mubr.f32.gmra.mrb[0].mxu0 %v1319
        %v1469 = vpop.f32.mrb[0].mxu0
        %v1470 = vadd.f32 0.0, %v1469
        %v1471 = vpop.f32.mrb[0].mxu0
        %1472 = vmatprep.mubr.f32.mxu0 0.0
        %1473 = vmatmul.mubr.f32.gmra.mrb[0].mxu0 %v1320
        %v1474 = vpop.f32.mrb[0].mxu0
        %v1475 = vadd.f32 0.0, %v1474
        %v1476 = vpop.f32.mrb[0].mxu0
        %1477 = vmatprep.mubr.f32.mxu0 0.0
        %1478 = vmatmul.mubr.f32.gmra.mrb[0].mxu0 %v1321
        %v1479 = vpop.f32.mrb[0].mxu0
        %v1480 = vadd.f32 0.0, %v1479
        %v1481 = vpop.f32.mrb[0].mxu0
        %1482 = vmatprep.mubr.f32.mxu0 0.0
        %1483 = vmatmul.mubr.f32.gmra.mrb[0].mxu0 %v1322
        %v1484 = vpop.f32.mrb[0].mxu0
        %v1485 = vadd.f32 0.0, %v1484
        %v1486 = vpop.f32.mrb[0].mxu0
        %1487 = vmatprep.mubr.f32.mxu0 0.0
        %1488 = vmatmul.mubr.f32.gmra.mrb[0].mxu0 %v1323
        %v1489 = vpop.f32.mrb[0].mxu0
        %v1490 = vadd.f32 0.0, %v1489
        %v1491 = vpop.f32.mrb[0].mxu0
        %1492 = vmatprep.mubr.f32.mxu0 0.0
        %1493 = vmatmul.mubr.f32.gmra.mrb[0].mxu0 %v1324
        %v1494 = vpop.f32.mrb[0].mxu0
        %v1495 = vadd.f32 0.0, %v1494
        %v1496 = vpop.f32.mrb[0].mxu0
        %1497 = vmatprep.mubr.f32.mxu0 0.0
        %1498 = vmatmul.mubr.f32.gmra.mrb[0].mxu0 %v1325
        %v1499 = vpop.f32.mrb[0].mxu0
        %v1500 = vadd.f32 0.0, %v1499
        %v1501 = vpop.f32.mrb[0].mxu0
        %1502 = vmatprep.mubr.f32.mxu0 0.0
        %1503 = vmatmul.mubr.f32.gmra.mrb[0].mxu0 %v1326
        %v1504 = vpop.f32.mrb[0].mxu0
        %v1505 = vadd.f32 0.0, %v1504
        %v1506 = vpop.f32.mrb[0].mxu0
        %1507 = vmatprep.mubr.f32.mxu0 0.0
        %1508 = vmatmul.mubr.f32.gmra.mrb[0].mxu0 %v1327
        %v1509 = vpop.f32.mrb[0].mxu0
        %v1510 = vadd.f32 0.0, %v1509
        %v1511 = vpop.f32.mrb[0].mxu0
        %1512 = vmatprep.mubr.f32.mxu0 0.0
        %1513 = vmatmul.mubr.f32.gmra.mrb[0].mxu0 %v1328
        %v1514 = vpop.f32.mrb[0].mxu0
        %v1515 = vadd.f32 0.0, %v1514
        %v1516 = vpop.f32.mrb[0].mxu0
        %1517 = vmatprep.mubr.f32.mxu0 0.0
        %1518 = vmatmul.mubr.f32.gmra.mrb[0].mxu0 %v1329
        %v1519 = vpop.f32.mrb[0].mxu0
        %v1520 = vadd.f32 0.0, %v1519
        %v1521 = vpop.f32.mrb[0].mxu0
        %1522 = vmatprep.mubr.f32.mxu0 0.0
        %1523 = vmatmul.mubr.f32.gmra.mrb[0].mxu0 %v1330
        %v1524 = vpop.f32.mrb[0].mxu0
        %v1525 = vadd.f32 0.0, %v1524
        %v1526 = vpop.f32.mrb[0].mxu0
        %1527 = vmatprep.mubr.f32.mxu0 0.0
        %1528 = vmatmul.mubr.f32.gmra.mrb[0].mxu0 %v1331
        %v1529 = vpop.f32.mrb[0].mxu0
        %v1530 = vadd.f32 0.0, %v1529
        %v1531 = vpop.f32.mrb[0].mxu0
        %1532 = vmatprep.mubr.f32.mxu0 0.0
        %1533 = vmatmul.mubr.f32.gmra.mrb[0].mxu0 %v1332
        %v1534 = vpop.f32.mrb[0].mxu0
        %v1535 = vadd.f32 0.0, %v1534
        %v1536 = vpop.f32.mrb[0].mxu0
        %1537 = vmatprep.mubr.f32.mxu0 0.0
        %1538 = vmatmul.mubr.f32.gmra.mrb[0].mxu0 %v1333
        %v1539 = vpop.f32.mrb[0].mxu0
        %v1540 = vadd.f32 0.0, %v1539
        %v1541 = vpop.f32.mrb[0].mxu0
        %1542 = vmatprep.mubr.f32.mxu0 0.0
        %1543 = vmatmul.mubr.f32.gmra.mrb[0].mxu0 %v1334
        %v1544 = vpop.f32.mrb[0].mxu0
        %v1545 = vadd.f32 0.0, %v1544
        %v1546 = vpop.f32.mrb[0].mxu0
        %1547 = vmatprep.mubr.f32.mxu0 0.0
        %1548 = vmatmul.mubr.f32.gmra.mrb[0].mxu0 %v1335
        %v1549 = vpop.f32.mrb[0].mxu0
        %v1550 = vadd.f32 0.0, %v1549
        %v1551 = vpop.f32.mrb[0].mxu0
        %1552 = vmatprep.mubr.f32.mxu0 0.0
        %1553 = vmatmul.mubr.f32.gmra.mrb[0].mxu0 %v1336
        %v1554 = vpop.f32.mrb[0].mxu0
        %v1555 = vadd.f32 0.0, %v1554
        %v1556 = vpop.f32.mrb[0].mxu0
        %1557 = vmatprep.mubr.f32.mxu0 0.0
        %1558 = vmatmul.mubr.f32.gmra.mrb[0].mxu0 %v1337
        %v1559 = vpop.f32.mrb[0].mxu0
        %v1560 = vadd.f32 0.0, %v1559
        %v1561 = vpop.f32.mrb[0].mxu0
        %1562 = vdwg.mxu0
        %1563 = vst.msk [vmem:[%s243] sm:$0xff] %vm303, %v1405
        %1564 = vst.msk [vmem:[%s243 + $0x8] sm:$0xff] %vm303, %v1410
        %1565 = vst.msk [vmem:[%s243 + $0x10] sm:$0xff] %vm303, %v1415
        %1566 = vst.msk [vmem:[%s243 + $0x18] sm:$0xff] %vm303, %v1420
        %1567 = vst.msk [vmem:[%s243 + $0x20] sm:$0xff] %vm303, %v1425
        %1568 = vst.msk [vmem:[%s243 + $0x28] sm:$0xff] %vm303, %v1430
        %1569 = vst.msk [vmem:[%s243 + $0x30] sm:$0xff] %vm303, %v1435
        %1570 = vst.msk [vmem:[%s243 + $0x38] sm:$0xff] %vm303, %v1440
        %1571 = vst.msk [vmem:[%s243 + $0x40] sm:$0xff] %vm303, %v1445
        %1572 = vst.msk [vmem:[%s243 + $0x48] sm:$0xff] %vm303, %v1450
        %1573 = vst.msk [vmem:[%s243 + $0x50] sm:$0xff] %vm303, %v1455
        %1574 = vst.msk [vmem:[%s243 + $0x58] sm:$0xff] %vm303, %v1460
        %1575 = vst.msk [vmem:[%s243 + $0x60] sm:$0xff] %vm303, %v1465
        %1576 = vst.msk [vmem:[%s243 + $0x68] sm:$0xff] %vm303, %v1470
        %1577 = vst.msk [vmem:[%s243 + $0x70] sm:$0xff] %vm303, %v1475
        %1578 = vst.msk [vmem:[%s243 + $0x78] sm:$0xff] %vm303, %v1480
        %1579 = vst.msk [vmem:[%s243 + $0x80] sm:$0xff] %vm303, %v1485
        %1580 = vst.msk [vmem:[%s243 + $0x88] sm:$0xff] %vm303, %v1490
        %1581 = vst.msk [vmem:[%s243 + $0x90] sm:$0xff] %vm303, %v1495
        %1582 = vst.msk [vmem:[%s243 + $0x98] sm:$0xff] %vm303, %v1500
        %1583 = vst.msk [vmem:[%s243 + $0xa0] sm:$0xff] %vm303, %v1505
        %1584 = vst.msk [vmem:[%s243 + $0xa8] sm:$0xff] %vm303, %v1510
        %1585 = vst.msk [vmem:[%s243 + $0xb0] sm:$0xff] %vm303, %v1515
        %1586 = vst.msk [vmem:[%s243 + $0xb8] sm:$0xff] %vm303, %v1520
        %1587 = vst.msk [vmem:[%s243 + $0xc0] sm:$0xff] %vm303, %v1525
        %1588 = vst.msk [vmem:[%s243 + $0xc8] sm:$0xff] %vm303, %v1530
        %1589 = vst.msk [vmem:[%s243 + $0xd0] sm:$0xff] %vm303, %v1535
        %1590 = vst.msk [vmem:[%s243 + $0xd8] sm:$0xff] %vm303, %v1540
        %1591 = vst.msk [vmem:[%s243 + $0xe0] sm:$0xff] %vm303, %v1545
        %1592 = vst.msk [vmem:[%s243 + $0xe8] sm:$0xff] %vm303, %v1550
        %1593 = vst.msk [vmem:[%s243 + $0xf0] sm:$0xff] %vm303, %v1555
        %1594 = vst.msk [vmem:[%s243 + $0xf8] sm:$0xff] %vm303, %v1560
        %vm1595 = vcmask 7168
        %1596 = vst.msk [vmem:[%s262] sm:$0xff] %vm1595, %v807
        %1597 = vst.msk [vmem:[%s262 + $0x8] sm:$0xff] %vm1595, %v821
        %1598 = vst.msk [vmem:[%s262 + $0x10] sm:$0xff] %vm1595, %v835
        %1599 = vst.msk [vmem:[%s262 + $0x18] sm:$0xff] %vm1595, %v849
        %1600 = vst.msk [vmem:[%s262 + $0x20] sm:$0xff] %vm1595, %v863
        %1601 = vst.msk [vmem:[%s262 + $0x28] sm:$0xff] %vm1595, %v877
        %1602 = vst.msk [vmem:[%s262 + $0x30] sm:$0xff] %vm1595, %v891
        %1603 = vst.msk [vmem:[%s262 + $0x38] sm:$0xff] %vm1595, %v905
        %1604 = vst.msk [vmem:[%s262 + $0x40] sm:$0xff] %vm1595, %v919
        %1605 = vst.msk [vmem:[%s262 + $0x48] sm:$0xff] %vm1595, %v933
        %1606 = vst.msk [vmem:[%s262 + $0x50] sm:$0xff] %vm1595, %v947
        %1607 = vst.msk [vmem:[%s262 + $0x58] sm:$0xff] %vm1595, %v961
        %1608 = vst.msk [vmem:[%s262 + $0x60] sm:$0xff] %vm1595, %v975
        %1609 = vst.msk [vmem:[%s262 + $0x68] sm:$0xff] %vm1595, %v989
        %1610 = vst.msk [vmem:[%s262 + $0x70] sm:$0xff] %vm1595, %v1003
        %1611 = vst.msk [vmem:[%s262 + $0x78] sm:$0xff] %vm1595, %v1017
        %1612 = vst.msk [vmem:[%s262 + $0x80] sm:$0xff] %vm1595, %v1031
        %1613 = vst.msk [vmem:[%s262 + $0x88] sm:$0xff] %vm1595, %v1045
        %1614 = vst.msk [vmem:[%s262 + $0x90] sm:$0xff] %vm1595, %v1059
        %1615 = vst.msk [vmem:[%s262 + $0x98] sm:$0xff] %vm1595, %v1073
        %1616 = vst.msk [vmem:[%s262 + $0xa0] sm:$0xff] %vm1595, %v1087
        %1617 = vst.msk [vmem:[%s262 + $0xa8] sm:$0xff] %vm1595, %v1101
        %1618 = vst.msk [vmem:[%s262 + $0xb0] sm:$0xff] %vm1595, %v1115
        %1619 = vst.msk [vmem:[%s262 + $0xb8] sm:$0xff] %vm1595, %v1129
        %1620 = vst.msk [vmem:[%s262 + $0xc0] sm:$0xff] %vm1595, %v1143
        %1621 = vst.msk [vmem:[%s262 + $0xc8] sm:$0xff] %vm1595, %v1157
        %1622 = vst.msk [vmem:[%s262 + $0xd0] sm:$0xff] %vm1595, %v1171
        %1623 = vst.msk [vmem:[%s262 + $0xd8] sm:$0xff] %vm1595, %v1185
        %1624 = vst.msk [vmem:[%s262 + $0xe0] sm:$0xff] %vm1595, %v1199
        %1625 = vst.msk [vmem:[%s262 + $0xe8] sm:$0xff] %vm1595, %v1213
        %1626 = vst.msk [vmem:[%s262 + $0xf0] sm:$0xff] %vm1595, %v1227
        %1627 = vst.msk [vmem:[%s262 + $0xf8] sm:$0xff] %vm1595, %v1241
        %v1628 = vsub.f32 %v1405, %v267
        %v1629 = vsub.f32 %v1410, %v268
        %v1630 = vsub.f32 %v1415, %v269
        %v1631 = vsub.f32 %v1420, %v270
        %v1632 = vsub.f32 %v1425, %v271
        %v1633 = vsub.f32 %v1430, %v272
        %v1634 = vsub.f32 %v1435, %v273
        %v1635 = vsub.f32 %v1440, %v274
        %v1636 = vsub.f32 %v1445, %v275
        %v1637 = vsub.f32 %v1450, %v276
        %v1638 = vsub.f32 %v1455, %v277
        %v1639 = vsub.f32 %v1460, %v278
        %v1640 = vsub.f32 %v1465, %v279
        %v1641 = vsub.f32 %v1470, %v280
        %v1642 = vsub.f32 %v1475, %v281
        %v1643 = vsub.f32 %v1480, %v282
        %v1644 = vsub.f32 %v1485, %v283
        %v1645 = vsub.f32 %v1490, %v284
        %v1646 = vsub.f32 %v1495, %v285
        %v1647 = vsub.f32 %v1500, %v286
        %v1648 = vsub.f32 %v1505, %v287
        %v1649 = vsub.f32 %v1510, %v288
        %v1650 = vsub.f32 %v1515, %v289
        %v1651 = vsub.f32 %v1520, %v290
        %v1652 = vsub.f32 %v1525, %v291
        %v1653 = vsub.f32 %v1530, %v292
        %v1654 = vsub.f32 %v1535, %v293
        %v1655 = vsub.f32 %v1540, %v294
        %v1656 = vsub.f32 %v1545, %v295
        %v1657 = vsub.f32 %v1550, %v296
        %v1658 = vsub.f32 %v1555, %v297
        %v1659 = vsub.f32 %v1560, %v298
        %v1660 = vmul.f32 %v1628, %v1628
        %v1661 = vmul.f32 %v1629, %v1629
        %v1662 = vmul.f32 %v1630, %v1630
        %v1663 = vmul.f32 %v1631, %v1631
        %v1664 = vmul.f32 %v1632, %v1632
        %v1665 = vmul.f32 %v1633, %v1633
        %v1666 = vmul.f32 %v1634, %v1634
        %v1667 = vmul.f32 %v1635, %v1635
        %v1668 = vmul.f32 %v1636, %v1636
        %v1669 = vmul.f32 %v1637, %v1637
        %v1670 = vmul.f32 %v1638, %v1638
        %v1671 = vmul.f32 %v1639, %v1639
        %v1672 = vmul.f32 %v1640, %v1640
        %v1673 = vmul.f32 %v1641, %v1641
        %v1674 = vmul.f32 %v1642, %v1642
        %v1675 = vmul.f32 %v1643, %v1643
        %v1676 = vmul.f32 %v1644, %v1644
        %v1677 = vmul.f32 %v1645, %v1645
        %v1678 = vmul.f32 %v1646, %v1646
        %v1679 = vmul.f32 %v1647, %v1647
        %v1680 = vmul.f32 %v1648, %v1648
        %v1681 = vmul.f32 %v1649, %v1649
        %v1682 = vmul.f32 %v1650, %v1650
        %v1683 = vmul.f32 %v1651, %v1651
        %v1684 = vmul.f32 %v1652, %v1652
        %v1685 = vmul.f32 %v1653, %v1653
        %v1686 = vmul.f32 %v1654, %v1654
        %v1687 = vmul.f32 %v1655, %v1655
        %v1688 = vmul.f32 %v1656, %v1656
        %v1689 = vmul.f32 %v1657, %v1657
        %v1690 = vmul.f32 %v1658, %v1658
        %v1691 = vmul.f32 %v1659, %v1659
        %v1692 = vsel %vm303, %v1660, 0.0
        %v1693 = vsel %vm303, %v1661, 0.0
        %v1694 = vadd.f32 %v1692, %v1693
        %v1695 = vsel %vm303, %v1662, 0.0
        %v1696 = vadd.f32 %v1694, %v1695
        %v1697 = vsel %vm303, %v1663, 0.0
        %v1698 = vadd.f32 %v1696, %v1697
        %v1699 = vsel %vm303, %v1664, 0.0
        %v1700 = vadd.f32 %v1698, %v1699
        %v1701 = vsel %vm303, %v1665, 0.0
        %v1702 = vadd.f32 %v1700, %v1701
        %v1703 = vsel %vm303, %v1666, 0.0
        %v1704 = vadd.f32 %v1702, %v1703
        %v1705 = vsel %vm303, %v1667, 0.0
        %v1706 = vadd.f32 %v1704, %v1705
        %v1707 = vsel %vm303, %v1668, 0.0
        %v1708 = vadd.f32 %v1706, %v1707
        %v1709 = vsel %vm303, %v1669, 0.0
        %v1710 = vadd.f32 %v1708, %v1709
        %v1711 = vsel %vm303, %v1670, 0.0
        %v1712 = vadd.f32 %v1710, %v1711
        %v1713 = vsel %vm303, %v1671, 0.0
        %v1714 = vadd.f32 %v1712, %v1713
        %v1715 = vsel %vm303, %v1672, 0.0
        %v1716 = vadd.f32 %v1714, %v1715
        %v1717 = vsel %vm303, %v1673, 0.0
        %v1718 = vadd.f32 %v1716, %v1717
        %v1719 = vsel %vm303, %v1674, 0.0
        %v1720 = vadd.f32 %v1718, %v1719
        %v1721 = vsel %vm303, %v1675, 0.0
        %v1722 = vadd.f32 %v1720, %v1721
        %v1723 = vsel %vm303, %v1676, 0.0
        %v1724 = vadd.f32 %v1722, %v1723
        %v1725 = vsel %vm303, %v1677, 0.0
        %v1726 = vadd.f32 %v1724, %v1725
        %v1727 = vsel %vm303, %v1678, 0.0
        %v1728 = vadd.f32 %v1726, %v1727
        %v1729 = vsel %vm303, %v1679, 0.0
        %v1730 = vadd.f32 %v1728, %v1729
        %v1731 = vsel %vm303, %v1680, 0.0
        %v1732 = vadd.f32 %v1730, %v1731
        %v1733 = vsel %vm303, %v1681, 0.0
        %v1734 = vadd.f32 %v1732, %v1733
        %v1735 = vsel %vm303, %v1682, 0.0
        %v1736 = vadd.f32 %v1734, %v1735
        %v1737 = vsel %vm303, %v1683, 0.0
        %v1738 = vadd.f32 %v1736, %v1737
        %v1739 = vsel %vm303, %v1684, 0.0
        %v1740 = vadd.f32 %v1738, %v1739
        %v1741 = vsel %vm303, %v1685, 0.0
        %v1742 = vadd.f32 %v1740, %v1741
        %v1743 = vsel %vm303, %v1686, 0.0
        %v1744 = vadd.f32 %v1742, %v1743
        %v1745 = vsel %vm303, %v1687, 0.0
        %v1746 = vadd.f32 %v1744, %v1745
        %v1747 = vsel %vm303, %v1688, 0.0
        %v1748 = vadd.f32 %v1746, %v1747
        %v1749 = vsel %vm303, %v1689, 0.0
        %v1750 = vadd.f32 %v1748, %v1749
        %v1751 = vsel %vm303, %v1690, 0.0
        %v1752 = vadd.f32 %v1750, %v1751
        %v1753 = vsel %vm303, %v1691, 0.0
        %v1754 = vadd.f32 %v1752, %v1753
        %1755 = vadd.xlane.f32.xlu0 %v1754
        %v1756 = vpop.xlane.xlu0 %1755
        %v1757 = vrot.slane %v1756, 4
        %v1758 = vadd.f32 %v1756, %v1757
        %v1759 = vrot.slane %v1758, 2
        %v1760 = vadd.f32 %v1758, %v1759
        %v1761 = vrot.slane %v1760, 1
        %v1762 = vadd.f32 %v1760, %v1761
        %s1763 = vtos %v1762
        %v1764 = vstv %s1763
        %vm1765 = vcmask 0
        %1766 = vst.msk [vmem:[%s266] sm:$0x1] %vm1765, %v1764
        %s1767 = sand.u32 %s99, 1
        %s1768 = scalar_lea.sflag [#allocation4], %s1767
        %s1769 = sand.u32 %s99, 1
        %s1770 = smul.addr %s1769, 256
        %s1771 = scalar_lea.vmem [#allocation5], %s1770
        %s1772 = smul.u32 32, %s23
        %p1773 = scmp.lt.s32.totalorder %s1772, 63
        %s1774 = scalar_select %p1773, %s1772, 63
        %s1775 = smul.addr %s1774, 8
        %s1776 = scalar_lea.vmem %s4, %s1775
        %p1777 = scmp.lt.s32.totalorder %s23, 1
        %s1778 = scalar_select %p1777, %s23, 1
        %s1779 = scalar_lea.vmem %s5, %s1778
        // Predicated region
        $region37: #{quantize_forward.1} parent=31 // pred_check
          %p1780 = pneg %p109
        $region38: #{quantize_forward.1} parent=31 // pred_check_branch
          %1782 = sbr.rel (%p1780) target = $region40
        $region39: #{quantize_forward.1} parent=31 // pred_region
          %s1783 = smul.u32 32, %s23
          %s1785 = ssub.s32 4096, 4096
          %1786 = vsyncadd %s1768, %s1785
          %s1787 = smul.addr %s1783, 128
          %s1788 = scalar_lea.hbm %s3, %s1787
          %s1789 = sshll.u32 %s1771, 4
          %s1790 = int_to_ptr.vmem [resolvable:$true] %s1789
          %1795 = dma.vmem_to_hbm [thread:$0]  %s1790, 4096, %s1788, %s1768, 128, 128, 8
        $region40: #{quantize_forward.1} parent=31 // pred_fallthru
          _
        // Predicated region
        $region41: #{quantize_forward.1} parent=31 // pred_check
          %p1796 = pneg %p135
        $region42: #{quantize_forward.1} parent=31 // pred_check_branch
          %1798 = sbr.rel (%p1796) target = $region44
        $region43: #{quantize_forward.1} parent=31 // pred_region
          %s1799 = smul.u32 32, %s23
        $region44: #{quantize_forward.1} parent=31 // pred_fallthru
          _
        // Predicated region
        $region45: #{quantize_forward.1} parent=31 // pred_check
          %p1800 = pneg %p161
        $region46: #{quantize_forward.1} parent=31 // pred_check_branch
          %1802 = sbr.rel (%p1800) target = $region48
        $region47: #{quantize_forward.1} parent=31 // pred_region
          _
        $region48: #{quantize_forward.1} parent=31 // pred_fallthru
          _
      $region32: #{quantize_forward.1} parent=5 // pred_fallthru
        _
      %p1803 = scmp.le.s32.totalorder 2, %s18
      // Predicated region
      $region49: #{quantize_forward.1} parent=5 // pred_check
        %p1804 = pneg %p1803
      $region50: #{quantize_forward.1} parent=5 // pred_check_branch
        %1806 = sbr.rel (%p1804) target = $region52
      $region51: #{quantize_forward.1} parent=5 // pred_region
        %s1807 = ssub.s32 %s18, 2
        // Predicated region
        $region53: #{quantize_forward.1} parent=51 // pred_check
          %p1808 = pneg %p115
        $region54: #{quantize_forward.1} parent=51 // pred_check_branch
          %1810 = sbr.rel (%p1808) target = $region56
        $region55: #{quantize_forward.1} parent=51 // pred_region
          %s1811 = sand.u32 %s100, 1
          %s1812 = scalar_lea.sflag [#allocation4], %s1811
          %s1813 = sand.u32 %s100, 1
          %s1814 = smul.addr %s1813, 256
          %s1815 = scalar_lea.vmem [#allocation5], %s1814
          %1816 = dma.done %s1812, 4096
        $region56: #{quantize_forward.1} parent=51 // pred_fallthru
          _
        // Predicated region
        $region57: #{quantize_forward.1} parent=51 // pred_check
          %p1817 = pneg %p141
        $region58: #{quantize_forward.1} parent=51 // pred_check_branch
          %1819 = sbr.rel (%p1817) target = $region60
        $region59: #{quantize_forward.1} parent=51 // pred_region
          %s1820 = smul.u32 32, %s24
          %p1821 = scmp.lt.s32.totalorder %s1820, 63
          %s1822 = scalar_select %p1821, %s1820, 63
          %s1823 = smul.addr %s1822, 8
          %s1824 = scalar_lea.vmem %s4, %s1823
        $region60: #{quantize_forward.1} parent=51 // pred_fallthru
          _
        // Predicated region
        $region61: #{quantize_forward.1} parent=51 // pred_check
          %p1825 = pneg %p167
        $region62: #{quantize_forward.1} parent=51 // pred_check_branch
          %1827 = sbr.rel (%p1825) target = $region64
        $region63: #{quantize_forward.1} parent=51 // pred_region
          %p1828 = scmp.lt.s32.totalorder %s24, 1
          %s1829 = scalar_select %p1828, %s24, 1
          %s1830 = scalar_lea.vmem %s5, %s1829
        $region64: #{quantize_forward.1} parent=51 // pred_fallthru
          _
      $region52: #{quantize_forward.1} parent=5 // pred_fallthru
        _
    $region6: #{quantize_forward.1} parent=1 // loop_footer
      %s22 = sadd.s32 1, %s18
    $region7: #{quantize_forward.1} parent=1 // loop_footer_branch
      %17 = sbr.rel target = $region3
    $region8: #{quantize_forward.1} parent=1 // loop_exit
      _
    %1831 = vsyncpa [#allocation3], 1
    %s1832 = scalar_lea.sflag [#allocation3], 1
    %1833 = vsyncpa %s1832, 1
    %1834 = vsyncpa [#allocation4], 1
    %s1835 = scalar_lea.sflag [#allocation4], 1
    %1836 = vsyncpa %s1835, 1

</llo_original>
